<compile_context>
chip_gen: v7x
topology: tpu7x:2x2x1
jax: 0.10.0
libtpu: 0.0.40
codegen_flags: <defaults>
</compile_context>

<pallas_src>
import functools

import jax
import jax.numpy as jnp
from jax.experimental import pallas as pl
from jax.experimental.pallas import tpu as pltpu

GS = 32            # lanes per gate sub-slab; requires char_hidden, n_hidden <= GS
NG = 4             # gates i, f, g, o
SLAB = NG * GS     # 128 = one vreg-wide packed gate slab
TP = 128           # padded tag lanes (lane-dense output store)


def _round_up(x, m):
    return ((x + m - 1) // m) * m


# ---------------------------------------------------------------------------
# LSTM cell on a packed gate slab (PyTorch gate order i, f, g, o).
# gates: (M, SLAB) with gate g in lanes [g*GS, g*GS + H); c, h: (M, GS).
# Padded lanes [H, GS) of each sub-slab have zero weights & bias, so with zero
# initial state they stay exactly zero (g=tanh(0)=0, c starts at 0).
# ---------------------------------------------------------------------------
def _cell(gates, c):
    i = jax.nn.sigmoid(gates[:, 0 * GS:1 * GS])
    f = jax.nn.sigmoid(gates[:, 1 * GS:2 * GS])
    g = jnp.tanh(gates[:, 2 * GS:3 * GS])
    o = jax.nn.sigmoid(gates[:, 3 * GS:4 * GS])
    c_new = f * c + i * g
    h_new = o * jnp.tanh(c_new)
    return h_new, c_new


# ---------------------------------------------------------------------------
# Fused kernel: one grid step == one sentence.
#   char one-hot -> char gate x-proj -> char LSTM -> word x-proj -> word LSTM
#   -> Linear -> log_softmax, all in VMEM/vregs.
# ---------------------------------------------------------------------------
def _make_kernel(seq_len, max_char_len):
    def kernel(char_ids_ref, word_ids_ref, len_ref,
               ec_ref, wc_hh_ref, bc_ref,
               ew_ref, wc2w_ref, ww_hh_ref, bw_ref,
               w_lin_ref, b_lin_ref,
               out_ref):
        w_pad = out_ref.shape[0]                       # words padded to sublane mult
        n_rows = char_ids_ref.shape[0]                 # max_char_len * w_pad (time-major)
        nc_pad = ec_ref.shape[0]
        nw_pad = ew_ref.shape[0]

        # ---- fused char-embedding gather + input projection (one-hot matmul;
        #      ec = char_emb @ W_ih_slab is pre-projected at pack time) --------
        char_ids = char_ids_ref[...]                   # (n_rows, 1) int32
        onehot_c = (jax.lax.broadcasted_iota(jnp.int32, (n_rows, nc_pad), 1)
                    == char_ids).astype(jnp.bfloat16)
        xg_c = (jnp.dot(onehot_c, ec_ref[...], preferred_element_type=jnp.float32)
                + bc_ref[...])                         # (n_rows, SLAB), vreg-resident

        # ---- char LSTM (batched over the words of the sentence) --------------
        lengths = len_ref[...]                         # (w_pad, 1) int32
        wc_hh = wc_hh_ref[...]                         # hoisted, (GS, SLAB) bf16
        h = jnp.zeros((w_pad, GS), jnp.float32)
        c = jnp.zeros((w_pad, GS), jnp.float32)
        for t in range(max_char_len):                  # static, fully unrolled
            gates = (xg_c[t * w_pad:(t + 1) * w_pad, :]          # aligned 8-row slice
                     + jnp.dot(h.astype(jnp.bfloat16), wc_hh,
                               preferred_element_type=jnp.float32))
            h_new, c_new = _cell(gates, c)
            valid = t < lengths                        # mask padded char positions
            h = jnp.where(valid, h_new, h)
            c = jnp.where(valid, c_new, c)
        char_feats = h.astype(jnp.bfloat16)            # (w_pad, GS); lanes >= Hc stay 0

        # ---- word LSTM input projection (word embedding fused the same way) --
        word_ids = word_ids_ref[...]                   # (w_pad, 1) int32
        onehot_w = (jax.lax.broadcasted_iota(jnp.int32, (w_pad, nw_pad), 1)
                    == word_ids).astype(jnp.bfloat16)
        xg_w = (jnp.dot(onehot_w, ew_ref[...], preferred_element_type=jnp.float32)
                + jnp.dot(char_feats, wc2w_ref[...], preferred_element_type=jnp.float32)
                + bw_ref[...])                         # (w_pad, SLAB)

        # ---- word LSTM recurrence --------------------------------------------
        ww_hh = ww_hh_ref[...]                         # hoisted, (GS, SLAB) bf16
        hw = jnp.zeros((1, GS), jnp.float32)
        cw = jnp.zeros((1, GS), jnp.float32)
        hs = []
        for t in range(seq_len):                       # static, fully unrolled
            gates = (xg_w[t:t + 1, :]
                     + jnp.dot(hw.astype(jnp.bfloat16), ww_hh,
                               preferred_element_type=jnp.float32))
            hw, cw = _cell(gates, cw)
            hs.append(hw)
        if w_pad > seq_len:
            hs.append(jnp.zeros((w_pad - seq_len, GS), jnp.float32))
        hs = jnp.concatenate(hs, axis=0)               # (w_pad, GS)

        # ---- Linear + log_softmax (padded tag lanes carry -1e30 bias) --------
        logits = (jnp.dot(hs.astype(jnp.bfloat16), w_lin_ref[...],
                          preferred_element_type=jnp.float32)
                  + b_lin_ref[...])                    # (w_pad, TP)
        m = jnp.max(logits, axis=-1, keepdims=True)
        shifted = logits - m
        lse = jnp.log(jnp.sum(jnp.exp(shifted), axis=-1, keepdims=True))
        out_ref[...] = shifted - lse                   # aligned (8,128) dense store

    return kernel


# ---------------------------------------------------------------------------
# Parameter init (shapes follow the module's __init__, PyTorch conventions)
# ---------------------------------------------------------------------------
def init_params(key, n_word, n_char, char_dim, n_dim, char_hidden, n_hidden, n_tag):
    ks = jax.random.split(key, 12)

    def unif(k, shape, bound):
        return jax.random.uniform(k, shape, jnp.float32, -bound, bound)

    kc = 1.0 / jnp.sqrt(char_hidden)
    kh = 1.0 / jnp.sqrt(n_hidden)
    in_dim = n_dim + char_hidden
    return dict(
        word_emb=jax.random.normal(ks[0], (n_word, n_dim), jnp.float32),
        char_emb=jax.random.normal(ks[1], (n_char, char_dim), jnp.float32),
        c_w_ih=unif(ks[2], (4 * char_hidden, char_dim), kc),
        c_w_hh=unif(ks[3], (4 * char_hidden, char_hidden), kc),
        c_b_ih=unif(ks[4], (4 * char_hidden,), kc),
        c_b_hh=unif(ks[5], (4 * char_hidden,), kc),
        w_ih=unif(ks[6], (4 * n_hidden, in_dim), kh),
        w_hh=unif(ks[7], (4 * n_hidden, n_hidden), kh),
        b_ih=unif(ks[8], (4 * n_hidden,), kh),
        b_hh=unif(ks[9], (4 * n_hidden,), kh),
        lin_w=unif(ks[10], (n_tag, n_hidden), kh),
        lin_b=unif(ks[11], (n_tag,), kh),
    )


# ---------------------------------------------------------------------------
# One-time weight packing into a single 128-lane gate slab ([i|f|g|o] x 32).
# ---------------------------------------------------------------------------
def _gate_cols(w, hd):
    """PyTorch LSTM weight (4*hd, In) -> (In, SLAB) with gate g at lanes
    [g*GS, g*GS+hd); other lanes zero (keeps padded gate lanes exactly zero)."""
    in_dim = w.shape[1]
    out = jnp.zeros((in_dim, SLAB), jnp.float32)
    for g in range(NG):
        out = out.at[:, g * GS:g * GS + hd].set(w[g * hd:(g + 1) * hd, :].T)
    return out


def _pad_rows(slab, rows):
    return jnp.zeros((rows, SLAB), slab.dtype).at[:slab.shape[0]].set(slab)


def _gate_bias(b, hd):
    out = jnp.zeros((1, SLAB), jnp.float32)
    for g in range(NG):
        out = out.at[0, g * GS:g * GS + hd].set(b[g * hd:(g + 1) * hd])
    return out


def pack_params(params):
    hi = jax.lax.Precision.HIGHEST
    char_emb, word_emb = params["char_emb"], params["word_emb"]
    n_char, _ = char_emb.shape
    n_word, n_dim = word_emb.shape
    hc = params["c_w_hh"].shape[1]
    h = params["w_hh"].shape[1]
    n_tag = params["lin_w"].shape[0]
    assert hc <= GS and h <= GS and n_tag <= TP

    nc_pad = _round_up(n_char, 16)
    nw_pad = _round_up(n_word, 16)
    ce = jnp.zeros((nc_pad, char_emb.shape[1]), jnp.float32).at[:n_char].set(char_emb)
    we = jnp.zeros((nw_pad, n_dim), jnp.float32).at[:n_word].set(word_emb)

    # Fused embedding + input-projection tables (row c = emb[c] @ W_ih slab).
    ec = jnp.dot(ce, _gate_cols(params["c_w_ih"], hc), precision=hi)
    ew = jnp.dot(we, _gate_cols(params["w_ih"][:, :n_dim], h), precision=hi)

    return dict(
        ec=ec.astype(jnp.bfloat16),                                     # (nc_pad, SLAB)
        wc_hh=_pad_rows(_gate_cols(params["c_w_hh"], hc), GS).astype(jnp.bfloat16),
        bc=_gate_bias(params["c_b_ih"] + params["c_b_hh"], hc),         # (1, SLAB) f32
        ew=ew.astype(jnp.bfloat16),                                     # (nw_pad, SLAB)
        wc2w=_pad_rows(_gate_cols(params["w_ih"][:, n_dim:], h), GS).astype(jnp.bfloat16),
        ww_hh=_pad_rows(_gate_cols(params["w_hh"], h), GS).astype(jnp.bfloat16),
        bw=_gate_bias(params["b_ih"] + params["b_hh"], h),              # (1, SLAB) f32
        w_lin=jnp.zeros((GS, TP), jnp.float32)
                 .at[:h, :n_tag].set(params["lin_w"].T).astype(jnp.bfloat16),
        b_lin=jnp.full((1, TP), -1e30, jnp.float32).at[0, :n_tag].set(params["lin_b"]),
    )


# ---------------------------------------------------------------------------
# Wrapper: batched LSTMTagger.forward.  One grid step per sentence.
# ---------------------------------------------------------------------------
def lstm_tagger_forward(packed, word_idx, char_idx, char_lens, *, n_tag):
    """word_idx: (B, W) int32; char_idx: (B, W, L) int32 (padded char slots hold
    any valid id, masked via char_lens); char_lens: (B, W) int32."""
    B, W = word_idx.shape
    L = char_idx.shape[2]
    w_pad = _round_up(W, 8)                 # sublane-aligned word rows
    N = L * w_pad

    def padw(x):
        widths = ((0, 0), (0, w_pad - W)) + ((0, 0),) * (x.ndim - 2)
        return jnp.pad(x.astype(jnp.int32), widths)     # padded words: id 0, len 0

    word_p = padw(word_idx).reshape(B, w_pad, 1)
    lens_p = padw(char_lens).reshape(B, w_pad, 1)
    # time-major char ids: row t*w_pad + w == char t of word w (aligned slabs of 8)
    char_tm = jnp.transpose(padw(char_idx), (0, 2, 1)).reshape(B, N, 1)

    nc_pad = packed["ec"].shape[0]
    nw_pad = packed["ew"].shape[0]
    flops = 2 * B * (N * nc_pad * SLAB + L * w_pad * GS * SLAB
                     + w_pad * (nw_pad + GS) * SLAB
                     + W * GS * SLAB + w_pad * GS * TP)
    trans = B * (5 * GS * (L * w_pad + W) + w_pad * (TP + 1))
    wbytes = sum(int(v.size) * jnp.dtype(v.dtype).itemsize for v in packed.values())
    bytes_accessed = B * (4 * (N + 2 * w_pad) + 4 * w_pad * TP) + wbytes

    def wspec(arr):
        return pl.BlockSpec(arr.shape, lambda b: (0, 0))

    out = pl.pallas_call(
        _make_kernel(W, L),
        out_shape=jax.ShapeDtypeStruct((B, w_pad, TP), jnp.float32),
        grid=(B,),
        in_specs=[
            pl.BlockSpec((None, N, 1), lambda b: (b, 0, 0)),        # char ids (time-major)
            pl.BlockSpec((None, w_pad, 1), lambda b: (b, 0, 0)),    # word ids
            pl.BlockSpec((None, w_pad, 1), lambda b: (b, 0, 0)),    # char lengths
            wspec(packed["ec"]), wspec(packed["wc_hh"]), wspec(packed["bc"]),
            wspec(packed["ew"]), wspec(packed["wc2w"]), wspec(packed["ww_hh"]),
            wspec(packed["bw"]), wspec(packed["w_lin"]), wspec(packed["b_lin"]),
        ],
        out_specs=pl.BlockSpec((None, w_pad, TP), lambda b: (b, 0, 0)),
        compiler_params=pltpu.CompilerParams(
            dimension_semantics=("parallel",)),         # megacore split on v7x
        cost_estimate=pl.CostEstimate(flops=int(flops), transcendentals=int(trans),
                                      bytes_accessed=int(bytes_accessed)),
    )(char_tm, word_p, lens_p,
      packed["ec"], packed["wc_hh"], packed["bc"],
      packed["ew"], packed["wc2w"], packed["ww_hh"], packed["bw"],
      packed["w_lin"], packed["b_lin"])
    return out[:, :W, :n_tag]


# ---------------------------------------------------------------------------
# Pure-JAX single-sentence reference (unpadded math) for a sanity check
# ---------------------------------------------------------------------------
def _ref_forward(params, word_idx, char_idx, char_lens):
    def cell(x_t, h, c, w_ih, w_hh, b):
        gates = x_t @ w_ih.T + h @ w_hh.T + b.reshape(1, -1)
        H = h.shape[-1]
        i = jax.nn.sigmoid(gates[:, :H])
        f = jax.nn.sigmoid(gates[:, H:2 * H])
        g = jnp.tanh(gates[:, 2 * H:3 * H])
        o = jax.nn.sigmoid(gates[:, 3 * H:])
        c_new = f * c + i * g
        return o * jnp.tanh(c_new), c_new

    seq_len, max_len = char_idx.shape
    Hc = params["c_w_hh"].shape[1]
    ce = jnp.take(params["char_emb"], char_idx, axis=0)
    h = jnp.zeros((seq_len, Hc)); c = jnp.zeros((seq_len, Hc))
    for t in range(max_len):
        hn, cn = cell(ce[:, t, :], h, c, params["c_w_ih"], params["c_w_hh"],
                      params["c_b_ih"] + params["c_b_hh"])
        m = (t < char_lens)[:, None]
        h = jnp.where(m, hn, h); c = jnp.where(m, cn, c)
    wv = jnp.take(params["word_emb"], word_idx, axis=0)
    x = jnp.concatenate([wv, h], axis=1)
    H = params["w_hh"].shape[1]
    hh = jnp.zeros((1, H)); cc = jnp.zeros((1, H)); hs = []
    for t in range(seq_len):
        hh, cc = cell(x[t:t + 1], hh, cc, params["w_ih"], params["w_hh"],
                      params["b_ih"] + params["b_hh"])
        hs.append(hh)
    hs = jnp.concatenate(hs, axis=0)
    logits = hs @ params["lin_w"].T + params["lin_b"]
    return jax.nn.log_softmax(logits, axis=-1)


if __name__ == "__main__":
    n_word, n_char = 20, 26
    char_dim, n_dim = 8, 16
    char_hidden, n_hidden, n_tag = 8, 32, 6
    B, seq_len, max_char_len = 4, 5, 7

    key = jax.random.PRNGKey(0)
    kp, kw, kc, kl = jax.random.split(key, 4)
    params = init_params(kp, n_word, n_char, char_dim, n_dim,
                         char_hidden, n_hidden, n_tag)

    word_idx = jax.random.randint(kw, (B, seq_len), 0, n_word, jnp.int32)
    char_idx = jax.random.randint(kc, (B, seq_len, max_char_len), 0, n_char, jnp.int32)
    char_lens = jax.random.randint(kl, (B, seq_len), 2, max_char_len + 1, jnp.int32)

    packed = pack_params(params)
    fwd = jax.jit(functools.partial(lstm_tagger_forward, n_tag=n_tag))
    out = jax.block_until_ready(fwd(packed, word_idx, char_idx, char_lens))

    with jax.default_matmul_precision("highest"):
        ref = jnp.stack([_ref_forward(params, word_idx[b], char_idx[b], char_lens[b])
                         for b in range(B)])

    assert out.shape == (B, seq_len, n_tag)
    # rows of log_softmax should exp-sum to 1 (padded tag lanes vanish exactly)
    assert jnp.allclose(jnp.sum(jnp.exp(out), axis=-1), 1.0, atol=1e-3)
    # bf16 weight slabs -> default-MXU-precision class error vs f32 reference
    assert jnp.allclose(out, ref, atol=2e-2), float(jnp.max(jnp.abs(out - ref)))

    print("KERNEL_OK")
</pallas_src>

<mosaic_0001>
module attributes {stable_mosaic.version = 11 : i64} {
  func.func @kernel(%arg0: i32, %arg1: memref<1x56x1xi32, #tpu.memory_space<vmem>>, %arg2: memref<1x8x1xi32, #tpu.memory_space<vmem>>, %arg3: memref<1x8x1xi32, #tpu.memory_space<vmem>>, %arg4: memref<32x128xbf16, #tpu.memory_space<vmem>>, %arg5: memref<32x128xbf16, #tpu.memory_space<vmem>>, %arg6: memref<1x128xf32, #tpu.memory_space<vmem>>, %arg7: memref<32x128xbf16, #tpu.memory_space<vmem>>, %arg8: memref<32x128xbf16, #tpu.memory_space<vmem>>, %arg9: memref<32x128xbf16, #tpu.memory_space<vmem>>, %arg10: memref<1x128xf32, #tpu.memory_space<vmem>>, %arg11: memref<32x128xbf16, #tpu.memory_space<vmem>>, %arg12: memref<1x128xf32, #tpu.memory_space<vmem>>, %arg13: memref<1x8x128xf32, #tpu.memory_space<vmem>>) attributes {dimension_semantics = [#tpu.dimension_semantics<parallel>], iteration_bounds = array<i64: 4>, scalar_prefetch = 0 : i64, scratch_operands = 0 : i64, tpu.core_type = #tpu.core_type<tc>, window_params = [{transform_indices = @transform_0, window_bounds = array<i64: 1, 56, 1>}, {transform_indices = @transform_1, window_bounds = array<i64: 1, 8, 1>}, {transform_indices = @transform_2, window_bounds = array<i64: 1, 8, 1>}, {pipeline_mode = #tpu.pipeline_mode<synchronous>, transform_indices = @transform_3, window_bounds = array<i64: 32, 128>}, {pipeline_mode = #tpu.pipeline_mode<synchronous>, transform_indices = @transform_4, window_bounds = array<i64: 32, 128>}, {pipeline_mode = #tpu.pipeline_mode<synchronous>, transform_indices = @transform_5, window_bounds = array<i64: 1, 128>}, {pipeline_mode = #tpu.pipeline_mode<synchronous>, transform_indices = @transform_6, window_bounds = array<i64: 32, 128>}, {pipeline_mode = #tpu.pipeline_mode<synchronous>, transform_indices = @transform_7, window_bounds = array<i64: 32, 128>}, {pipeline_mode = #tpu.pipeline_mode<synchronous>, transform_indices = @transform_8, window_bounds = array<i64: 32, 128>}, {pipeline_mode = #tpu.pipeline_mode<synchronous>, transform_indices = @transform_9, window_bounds = array<i64: 1, 128>}, {pipeline_mode = #tpu.pipeline_mode<synchronous>, transform_indices = @transform_10, window_bounds = array<i64: 32, 128>}, {pipeline_mode = #tpu.pipeline_mode<synchronous>, transform_indices = @transform_11, window_bounds = array<i64: 1, 128>}, {transform_indices = @transform_12, window_bounds = array<i64: 1, 8, 128>}]} {
    %c0 = arith.constant 0 : index
    %c0_0 = arith.constant 0 : index
    %c0_1 = arith.constant 0 : index
    %0 = vector.load %arg1[%c0, %c0_0, %c0_1] : memref<1x56x1xi32, #tpu.memory_space<vmem>>, vector<1x56x1xi32>
    %1 = vector.shape_cast %0 : vector<1x56x1xi32> to vector<56x1xi32>
    %2 = tpu.iota {dimensions = array<i32: 1>} : vector<56x32xi32>
    %3 = vector.broadcast %1 : vector<56x1xi32> to vector<56x32xi32>
    %4 = arith.cmpi eq, %2, %3 : vector<56x32xi32>
    %5 = arith.extui %4 : vector<56x32xi1> to vector<56x32xi32>
    %6 = arith.sitofp %5 : vector<56x32xi32> to vector<56x32xf32>
    %7 = arith.truncf %6 : vector<56x32xf32> to vector<56x32xbf16>
    %c0_2 = arith.constant 0 : index
    %c0_3 = arith.constant 0 : index
    %8 = vector.load %arg4[%c0_2, %c0_3] : memref<32x128xbf16, #tpu.memory_space<vmem>>, vector<32x128xbf16>
    %cst = arith.constant dense<0.000000e+00> : vector<56x128xf32>
    %9 = tpu.matmul %7, %8, %cst {dimension_numbers = #tpu.dot_dimension_numbers<[1], [0], [0], [1], [0, 0, 1, 1], [], []>} : vector<56x32xbf16>, vector<32x128xbf16>, vector<56x128xf32> -> vector<56x128xf32>
    %c0_4 = arith.constant 0 : index
    %c0_5 = arith.constant 0 : index
    %10 = vector.load %arg6[%c0_4, %c0_5] : memref<1x128xf32, #tpu.memory_space<vmem>>, vector<1x128xf32>
    %11 = vector.broadcast %10 : vector<1x128xf32> to vector<56x128xf32>
    %12 = arith.addf %9, %11 : vector<56x128xf32>
    %c0_6 = arith.constant 0 : index
    %c0_7 = arith.constant 0 : index
    %c0_8 = arith.constant 0 : index
    %13 = vector.load %arg3[%c0_6, %c0_7, %c0_8] : memref<1x8x1xi32, #tpu.memory_space<vmem>>, vector<1x8x1xi32>
    %14 = vector.shape_cast %13 : vector<1x8x1xi32> to vector<8x1xi32>
    %c0_9 = arith.constant 0 : index
    %c0_10 = arith.constant 0 : index
    %15 = vector.load %arg5[%c0_9, %c0_10] : memref<32x128xbf16, #tpu.memory_space<vmem>>, vector<32x128xbf16>
    %cst_11 = arith.constant 0.000000e+00 : f32
    %16 = vector.broadcast %cst_11 : f32 to vector<8x32xf32>
    %cst_12 = arith.constant 0.000000e+00 : f32
    %17 = vector.broadcast %cst_12 : f32 to vector<8x32xf32>
    %18 = vector.extract_strided_slice %12 {offsets = [0, 0], sizes = [8, 128], strides = [1, 1]} : vector<56x128xf32> to vector<8x128xf32>
    %19 = arith.truncf %16 : vector<8x32xf32> to vector<8x32xbf16>
    %cst_13 = arith.constant dense<0.000000e+00> : vector<8x128xf32>
    %20 = tpu.matmul %19, %15, %cst_13 {dimension_numbers = #tpu.dot_dimension_numbers<[1], [0], [0], [1], [0, 0, 1, 1], [], []>} : vector<8x32xbf16>, vector<32x128xbf16>, vector<8x128xf32> -> vector<8x128xf32>
    %21 = arith.addf %18, %20 : vector<8x128xf32>
    %22 = vector.extract_strided_slice %21 {offsets = [0, 0], sizes = [8, 32], strides = [1, 1]} : vector<8x128xf32> to vector<8x32xf32>
    %23 = arith.negf %22 : vector<8x32xf32>
    %24 = math.exp %23 : vector<8x32xf32>
    %cst_14 = arith.constant 1.000000e+00 : f32
    %25 = vector.broadcast %cst_14 : f32 to vector<8x32xf32>
    %26 = arith.addf %25, %24 : vector<8x32xf32>
    %27 = arith.divf %25, %26 : vector<8x32xf32>
    %28 = vector.extract_strided_slice %21 {offsets = [0, 32], sizes = [8, 32], strides = [1, 1]} : vector<8x128xf32> to vector<8x32xf32>
    %29 = arith.negf %28 : vector<8x32xf32>
    %30 = math.exp %29 : vector<8x32xf32>
    %cst_15 = arith.constant 1.000000e+00 : f32
    %31 = vector.broadcast %cst_15 : f32 to vector<8x32xf32>
    %32 = arith.addf %31, %30 : vector<8x32xf32>
    %33 = arith.divf %31, %32 : vector<8x32xf32>
    %34 = vector.extract_strided_slice %21 {offsets = [0, 64], sizes = [8, 32], strides = [1, 1]} : vector<8x128xf32> to vector<8x32xf32>
    %35 = math.tanh %34 : vector<8x32xf32>
    %36 = vector.extract_strided_slice %21 {offsets = [0, 96], sizes = [8, 32], strides = [1, 1]} : vector<8x128xf32> to vector<8x32xf32>
    %37 = arith.negf %36 : vector<8x32xf32>
    %38 = math.exp %37 : vector<8x32xf32>
    %cst_16 = arith.constant 1.000000e+00 : f32
    %39 = vector.broadcast %cst_16 : f32 to vector<8x32xf32>
    %40 = arith.addf %39, %38 : vector<8x32xf32>
    %41 = arith.divf %39, %40 : vector<8x32xf32>
    %42 = arith.mulf %33, %17 : vector<8x32xf32>
    %43 = arith.mulf %27, %35 : vector<8x32xf32>
    %44 = arith.addf %42, %43 : vector<8x32xf32>
    %45 = math.tanh %44 : vector<8x32xf32>
    %46 = arith.mulf %41, %45 : vector<8x32xf32>
    %c0_i32 = arith.constant 0 : i32
    %47 = vector.broadcast %c0_i32 : i32 to vector<8x1xi32>
    %48 = arith.cmpi sgt, %14, %47 : vector<8x1xi32>
    %49 = vector.shape_cast %48 : vector<8x1xi1> to vector<8x1xi1>
    %50 = vector.broadcast %49 : vector<8x1xi1> to vector<8x32xi1>
    %51 = arith.select %50, %46, %16 : vector<8x32xi1>, vector<8x32xf32>
    %52 = vector.shape_cast %48 : vector<8x1xi1> to vector<8x1xi1>
    %53 = vector.broadcast %52 : vector<8x1xi1> to vector<8x32xi1>
    %54 = arith.select %53, %44, %17 : vector<8x32xi1>, vector<8x32xf32>
    %55 = vector.extract_strided_slice %12 {offsets = [8, 0], sizes = [8, 128], strides = [1, 1]} : vector<56x128xf32> to vector<8x128xf32>
    %56 = arith.truncf %51 : vector<8x32xf32> to vector<8x32xbf16>
    %cst_17 = arith.constant dense<0.000000e+00> : vector<8x128xf32>
    %57 = tpu.matmul %56, %15, %cst_17 {dimension_numbers = #tpu.dot_dimension_numbers<[1], [0], [0], [1], [0, 0, 1, 1], [], []>} : vector<8x32xbf16>, vector<32x128xbf16>, vector<8x128xf32> -> vector<8x128xf32>
    %58 = arith.addf %55, %57 : vector<8x128xf32>
    %59 = vector.extract_strided_slice %58 {offsets = [0, 0], sizes = [8, 32], strides = [1, 1]} : vector<8x128xf32> to vector<8x32xf32>
    %60 = arith.negf %59 : vector<8x32xf32>
    %61 = math.exp %60 : vector<8x32xf32>
    %cst_18 = arith.constant 1.000000e+00 : f32
    %62 = vector.broadcast %cst_18 : f32 to vector<8x32xf32>
    %63 = arith.addf %62, %61 : vector<8x32xf32>
    %64 = arith.divf %62, %63 : vector<8x32xf32>
    %65 = vector.extract_strided_slice %58 {offsets = [0, 32], sizes = [8, 32], strides = [1, 1]} : vector<8x128xf32> to vector<8x32xf32>
    %66 = arith.negf %65 : vector<8x32xf32>
    %67 = math.exp %66 : vector<8x32xf32>
    %cst_19 = arith.constant 1.000000e+00 : f32
    %68 = vector.broadcast %cst_19 : f32 to vector<8x32xf32>
    %69 = arith.addf %68, %67 : vector<8x32xf32>
    %70 = arith.divf %68, %69 : vector<8x32xf32>
    %71 = vector.extract_strided_slice %58 {offsets = [0, 64], sizes = [8, 32], strides = [1, 1]} : vector<8x128xf32> to vector<8x32xf32>
    %72 = math.tanh %71 : vector<8x32xf32>
    %73 = vector.extract_strided_slice %58 {offsets = [0, 96], sizes = [8, 32], strides = [1, 1]} : vector<8x128xf32> to vector<8x32xf32>
    %74 = arith.negf %73 : vector<8x32xf32>
    %75 = math.exp %74 : vector<8x32xf32>
    %cst_20 = arith.constant 1.000000e+00 : f32
    %76 = vector.broadcast %cst_20 : f32 to vector<8x32xf32>
    %77 = arith.addf %76, %75 : vector<8x32xf32>
    %78 = arith.divf %76, %77 : vector<8x32xf32>
    %79 = arith.mulf %70, %54 : vector<8x32xf32>
    %80 = arith.mulf %64, %72 : vector<8x32xf32>
    %81 = arith.addf %79, %80 : vector<8x32xf32>
    %82 = math.tanh %81 : vector<8x32xf32>
    %83 = arith.mulf %78, %82 : vector<8x32xf32>
    %c1_i32 = arith.constant 1 : i32
    %84 = vector.broadcast %c1_i32 : i32 to vector<8x1xi32>
    %85 = arith.cmpi sgt, %14, %84 : vector<8x1xi32>
    %86 = vector.shape_cast %85 : vector<8x1xi1> to vector<8x1xi1>
    %87 = vector.broadcast %86 : vector<8x1xi1> to vector<8x32xi1>
    %88 = arith.select %87, %83, %51 : vector<8x32xi1>, vector<8x32xf32>
    %89 = vector.shape_cast %85 : vector<8x1xi1> to vector<8x1xi1>
    %90 = vector.broadcast %89 : vector<8x1xi1> to vector<8x32xi1>
    %91 = arith.select %90, %81, %54 : vector<8x32xi1>, vector<8x32xf32>
    %92 = vector.extract_strided_slice %12 {offsets = [16, 0], sizes = [8, 128], strides = [1, 1]} : vector<56x128xf32> to vector<8x128xf32>
    %93 = arith.truncf %88 : vector<8x32xf32> to vector<8x32xbf16>
    %cst_21 = arith.constant dense<0.000000e+00> : vector<8x128xf32>
    %94 = tpu.matmul %93, %15, %cst_21 {dimension_numbers = #tpu.dot_dimension_numbers<[1], [0], [0], [1], [0, 0, 1, 1], [], []>} : vector<8x32xbf16>, vector<32x128xbf16>, vector<8x128xf32> -> vector<8x128xf32>
    %95 = arith.addf %92, %94 : vector<8x128xf32>
    %96 = vector.extract_strided_slice %95 {offsets = [0, 0], sizes = [8, 32], strides = [1, 1]} : vector<8x128xf32> to vector<8x32xf32>
    %97 = arith.negf %96 : vector<8x32xf32>
    %98 = math.exp %97 : vector<8x32xf32>
    %cst_22 = arith.constant 1.000000e+00 : f32
    %99 = vector.broadcast %cst_22 : f32 to vector<8x32xf32>
    %100 = arith.addf %99, %98 : vector<8x32xf32>
    %101 = arith.divf %99, %100 : vector<8x32xf32>
    %102 = vector.extract_strided_slice %95 {offsets = [0, 32], sizes = [8, 32], strides = [1, 1]} : vector<8x128xf32> to vector<8x32xf32>
    %103 = arith.negf %102 : vector<8x32xf32>
    %104 = math.exp %103 : vector<8x32xf32>
    %cst_23 = arith.constant 1.000000e+00 : f32
    %105 = vector.broadcast %cst_23 : f32 to vector<8x32xf32>
    %106 = arith.addf %105, %104 : vector<8x32xf32>
    %107 = arith.divf %105, %106 : vector<8x32xf32>
    %108 = vector.extract_strided_slice %95 {offsets = [0, 64], sizes = [8, 32], strides = [1, 1]} : vector<8x128xf32> to vector<8x32xf32>
    %109 = math.tanh %108 : vector<8x32xf32>
    %110 = vector.extract_strided_slice %95 {offsets = [0, 96], sizes = [8, 32], strides = [1, 1]} : vector<8x128xf32> to vector<8x32xf32>
    %111 = arith.negf %110 : vector<8x32xf32>
    %112 = math.exp %111 : vector<8x32xf32>
    %cst_24 = arith.constant 1.000000e+00 : f32
    %113 = vector.broadcast %cst_24 : f32 to vector<8x32xf32>
    %114 = arith.addf %113, %112 : vector<8x32xf32>
    %115 = arith.divf %113, %114 : vector<8x32xf32>
    %116 = arith.mulf %107, %91 : vector<8x32xf32>
    %117 = arith.mulf %101, %109 : vector<8x32xf32>
    %118 = arith.addf %116, %117 : vector<8x32xf32>
    %119 = math.tanh %118 : vector<8x32xf32>
    %120 = arith.mulf %115, %119 : vector<8x32xf32>
    %c2_i32 = arith.constant 2 : i32
    %121 = vector.broadcast %c2_i32 : i32 to vector<8x1xi32>
    %122 = arith.cmpi sgt, %14, %121 : vector<8x1xi32>
    %123 = vector.shape_cast %122 : vector<8x1xi1> to vector<8x1xi1>
    %124 = vector.broadcast %123 : vector<8x1xi1> to vector<8x32xi1>
    %125 = arith.select %124, %120, %88 : vector<8x32xi1>, vector<8x32xf32>
    %126 = vector.shape_cast %122 : vector<8x1xi1> to vector<8x1xi1>
    %127 = vector.broadcast %126 : vector<8x1xi1> to vector<8x32xi1>
    %128 = arith.select %127, %118, %91 : vector<8x32xi1>, vector<8x32xf32>
    %129 = vector.extract_strided_slice %12 {offsets = [24, 0], sizes = [8, 128], strides = [1, 1]} : vector<56x128xf32> to vector<8x128xf32>
    %130 = arith.truncf %125 : vector<8x32xf32> to vector<8x32xbf16>
    %cst_25 = arith.constant dense<0.000000e+00> : vector<8x128xf32>
    %131 = tpu.matmul %130, %15, %cst_25 {dimension_numbers = #tpu.dot_dimension_numbers<[1], [0], [0], [1], [0, 0, 1, 1], [], []>} : vector<8x32xbf16>, vector<32x128xbf16>, vector<8x128xf32> -> vector<8x128xf32>
    %132 = arith.addf %129, %131 : vector<8x128xf32>
    %133 = vector.extract_strided_slice %132 {offsets = [0, 0], sizes = [8, 32], strides = [1, 1]} : vector<8x128xf32> to vector<8x32xf32>
    %134 = arith.negf %133 : vector<8x32xf32>
    %135 = math.exp %134 : vector<8x32xf32>
    %cst_26 = arith.constant 1.000000e+00 : f32
    %136 = vector.broadcast %cst_26 : f32 to vector<8x32xf32>
    %137 = arith.addf %136, %135 : vector<8x32xf32>
    %138 = arith.divf %136, %137 : vector<8x32xf32>
    %139 = vector.extract_strided_slice %132 {offsets = [0, 32], sizes = [8, 32], strides = [1, 1]} : vector<8x128xf32> to vector<8x32xf32>
    %140 = arith.negf %139 : vector<8x32xf32>
    %141 = math.exp %140 : vector<8x32xf32>
    %cst_27 = arith.constant 1.000000e+00 : f32
    %142 = vector.broadcast %cst_27 : f32 to vector<8x32xf32>
    %143 = arith.addf %142, %141 : vector<8x32xf32>
    %144 = arith.divf %142, %143 : vector<8x32xf32>
    %145 = vector.extract_strided_slice %132 {offsets = [0, 64], sizes = [8, 32], strides = [1, 1]} : vector<8x128xf32> to vector<8x32xf32>
    %146 = math.tanh %145 : vector<8x32xf32>
    %147 = vector.extract_strided_slice %132 {offsets = [0, 96], sizes = [8, 32], strides = [1, 1]} : vector<8x128xf32> to vector<8x32xf32>
    %148 = arith.negf %147 : vector<8x32xf32>
    %149 = math.exp %148 : vector<8x32xf32>
    %cst_28 = arith.constant 1.000000e+00 : f32
    %150 = vector.broadcast %cst_28 : f32 to vector<8x32xf32>
    %151 = arith.addf %150, %149 : vector<8x32xf32>
    %152 = arith.divf %150, %151 : vector<8x32xf32>
    %153 = arith.mulf %144, %128 : vector<8x32xf32>
    %154 = arith.mulf %138, %146 : vector<8x32xf32>
    %155 = arith.addf %153, %154 : vector<8x32xf32>
    %156 = math.tanh %155 : vector<8x32xf32>
    %157 = arith.mulf %152, %156 : vector<8x32xf32>
    %c3_i32 = arith.constant 3 : i32
    %158 = vector.broadcast %c3_i32 : i32 to vector<8x1xi32>
    %159 = arith.cmpi sgt, %14, %158 : vector<8x1xi32>
    %160 = vector.shape_cast %159 : vector<8x1xi1> to vector<8x1xi1>
    %161 = vector.broadcast %160 : vector<8x1xi1> to vector<8x32xi1>
    %162 = arith.select %161, %157, %125 : vector<8x32xi1>, vector<8x32xf32>
    %163 = vector.shape_cast %159 : vector<8x1xi1> to vector<8x1xi1>
    %164 = vector.broadcast %163 : vector<8x1xi1> to vector<8x32xi1>
    %165 = arith.select %164, %155, %128 : vector<8x32xi1>, vector<8x32xf32>
    %166 = vector.extract_strided_slice %12 {offsets = [32, 0], sizes = [8, 128], strides = [1, 1]} : vector<56x128xf32> to vector<8x128xf32>
    %167 = arith.truncf %162 : vector<8x32xf32> to vector<8x32xbf16>
    %cst_29 = arith.constant dense<0.000000e+00> : vector<8x128xf32>
    %168 = tpu.matmul %167, %15, %cst_29 {dimension_numbers = #tpu.dot_dimension_numbers<[1], [0], [0], [1], [0, 0, 1, 1], [], []>} : vector<8x32xbf16>, vector<32x128xbf16>, vector<8x128xf32> -> vector<8x128xf32>
    %169 = arith.addf %166, %168 : vector<8x128xf32>
    %170 = vector.extract_strided_slice %169 {offsets = [0, 0], sizes = [8, 32], strides = [1, 1]} : vector<8x128xf32> to vector<8x32xf32>
    %171 = arith.negf %170 : vector<8x32xf32>
    %172 = math.exp %171 : vector<8x32xf32>
    %cst_30 = arith.constant 1.000000e+00 : f32
    %173 = vector.broadcast %cst_30 : f32 to vector<8x32xf32>
    %174 = arith.addf %173, %172 : vector<8x32xf32>
    %175 = arith.divf %173, %174 : vector<8x32xf32>
    %176 = vector.extract_strided_slice %169 {offsets = [0, 32], sizes = [8, 32], strides = [1, 1]} : vector<8x128xf32> to vector<8x32xf32>
    %177 = arith.negf %176 : vector<8x32xf32>
    %178 = math.exp %177 : vector<8x32xf32>
    %cst_31 = arith.constant 1.000000e+00 : f32
    %179 = vector.broadcast %cst_31 : f32 to vector<8x32xf32>
    %180 = arith.addf %179, %178 : vector<8x32xf32>
    %181 = arith.divf %179, %180 : vector<8x32xf32>
    %182 = vector.extract_strided_slice %169 {offsets = [0, 64], sizes = [8, 32], strides = [1, 1]} : vector<8x128xf32> to vector<8x32xf32>
    %183 = math.tanh %182 : vector<8x32xf32>
    %184 = vector.extract_strided_slice %169 {offsets = [0, 96], sizes = [8, 32], strides = [1, 1]} : vector<8x128xf32> to vector<8x32xf32>
    %185 = arith.negf %184 : vector<8x32xf32>
    %186 = math.exp %185 : vector<8x32xf32>
    %cst_32 = arith.constant 1.000000e+00 : f32
    %187 = vector.broadcast %cst_32 : f32 to vector<8x32xf32>
    %188 = arith.addf %187, %186 : vector<8x32xf32>
    %189 = arith.divf %187, %188 : vector<8x32xf32>
    %190 = arith.mulf %181, %165 : vector<8x32xf32>
    %191 = arith.mulf %175, %183 : vector<8x32xf32>
    %192 = arith.addf %190, %191 : vector<8x32xf32>
    %193 = math.tanh %192 : vector<8x32xf32>
    %194 = arith.mulf %189, %193 : vector<8x32xf32>
    %c4_i32 = arith.constant 4 : i32
    %195 = vector.broadcast %c4_i32 : i32 to vector<8x1xi32>
    %196 = arith.cmpi sgt, %14, %195 : vector<8x1xi32>
    %197 = vector.shape_cast %196 : vector<8x1xi1> to vector<8x1xi1>
    %198 = vector.broadcast %197 : vector<8x1xi1> to vector<8x32xi1>
    %199 = arith.select %198, %194, %162 : vector<8x32xi1>, vector<8x32xf32>
    %200 = vector.shape_cast %196 : vector<8x1xi1> to vector<8x1xi1>
    %201 = vector.broadcast %200 : vector<8x1xi1> to vector<8x32xi1>
    %202 = arith.select %201, %192, %165 : vector<8x32xi1>, vector<8x32xf32>
    %203 = vector.extract_strided_slice %12 {offsets = [40, 0], sizes = [8, 128], strides = [1, 1]} : vector<56x128xf32> to vector<8x128xf32>
    %204 = arith.truncf %199 : vector<8x32xf32> to vector<8x32xbf16>
    %cst_33 = arith.constant dense<0.000000e+00> : vector<8x128xf32>
    %205 = tpu.matmul %204, %15, %cst_33 {dimension_numbers = #tpu.dot_dimension_numbers<[1], [0], [0], [1], [0, 0, 1, 1], [], []>} : vector<8x32xbf16>, vector<32x128xbf16>, vector<8x128xf32> -> vector<8x128xf32>
    %206 = arith.addf %203, %205 : vector<8x128xf32>
    %207 = vector.extract_strided_slice %206 {offsets = [0, 0], sizes = [8, 32], strides = [1, 1]} : vector<8x128xf32> to vector<8x32xf32>
    %208 = arith.negf %207 : vector<8x32xf32>
    %209 = math.exp %208 : vector<8x32xf32>
    %cst_34 = arith.constant 1.000000e+00 : f32
    %210 = vector.broadcast %cst_34 : f32 to vector<8x32xf32>
    %211 = arith.addf %210, %209 : vector<8x32xf32>
    %212 = arith.divf %210, %211 : vector<8x32xf32>
    %213 = vector.extract_strided_slice %206 {offsets = [0, 32], sizes = [8, 32], strides = [1, 1]} : vector<8x128xf32> to vector<8x32xf32>
    %214 = arith.negf %213 : vector<8x32xf32>
    %215 = math.exp %214 : vector<8x32xf32>
    %cst_35 = arith.constant 1.000000e+00 : f32
    %216 = vector.broadcast %cst_35 : f32 to vector<8x32xf32>
    %217 = arith.addf %216, %215 : vector<8x32xf32>
    %218 = arith.divf %216, %217 : vector<8x32xf32>
    %219 = vector.extract_strided_slice %206 {offsets = [0, 64], sizes = [8, 32], strides = [1, 1]} : vector<8x128xf32> to vector<8x32xf32>
    %220 = math.tanh %219 : vector<8x32xf32>
    %221 = vector.extract_strided_slice %206 {offsets = [0, 96], sizes = [8, 32], strides = [1, 1]} : vector<8x128xf32> to vector<8x32xf32>
    %222 = arith.negf %221 : vector<8x32xf32>
    %223 = math.exp %222 : vector<8x32xf32>
    %cst_36 = arith.constant 1.000000e+00 : f32
    %224 = vector.broadcast %cst_36 : f32 to vector<8x32xf32>
    %225 = arith.addf %224, %223 : vector<8x32xf32>
    %226 = arith.divf %224, %225 : vector<8x32xf32>
    %227 = arith.mulf %218, %202 : vector<8x32xf32>
    %228 = arith.mulf %212, %220 : vector<8x32xf32>
    %229 = arith.addf %227, %228 : vector<8x32xf32>
    %230 = math.tanh %229 : vector<8x32xf32>
    %231 = arith.mulf %226, %230 : vector<8x32xf32>
    %c5_i32 = arith.constant 5 : i32
    %232 = vector.broadcast %c5_i32 : i32 to vector<8x1xi32>
    %233 = arith.cmpi sgt, %14, %232 : vector<8x1xi32>
    %234 = vector.shape_cast %233 : vector<8x1xi1> to vector<8x1xi1>
    %235 = vector.broadcast %234 : vector<8x1xi1> to vector<8x32xi1>
    %236 = arith.select %235, %231, %199 : vector<8x32xi1>, vector<8x32xf32>
    %237 = vector.shape_cast %233 : vector<8x1xi1> to vector<8x1xi1>
    %238 = vector.broadcast %237 : vector<8x1xi1> to vector<8x32xi1>
    %239 = arith.select %238, %229, %202 : vector<8x32xi1>, vector<8x32xf32>
    %240 = vector.extract_strided_slice %12 {offsets = [48, 0], sizes = [8, 128], strides = [1, 1]} : vector<56x128xf32> to vector<8x128xf32>
    %241 = arith.truncf %236 : vector<8x32xf32> to vector<8x32xbf16>
    %cst_37 = arith.constant dense<0.000000e+00> : vector<8x128xf32>
    %242 = tpu.matmul %241, %15, %cst_37 {dimension_numbers = #tpu.dot_dimension_numbers<[1], [0], [0], [1], [0, 0, 1, 1], [], []>} : vector<8x32xbf16>, vector<32x128xbf16>, vector<8x128xf32> -> vector<8x128xf32>
    %243 = arith.addf %240, %242 : vector<8x128xf32>
    %244 = vector.extract_strided_slice %243 {offsets = [0, 0], sizes = [8, 32], strides = [1, 1]} : vector<8x128xf32> to vector<8x32xf32>
    %245 = arith.negf %244 : vector<8x32xf32>
    %246 = math.exp %245 : vector<8x32xf32>
    %cst_38 = arith.constant 1.000000e+00 : f32
    %247 = vector.broadcast %cst_38 : f32 to vector<8x32xf32>
    %248 = arith.addf %247, %246 : vector<8x32xf32>
    %249 = arith.divf %247, %248 : vector<8x32xf32>
    %250 = vector.extract_strided_slice %243 {offsets = [0, 32], sizes = [8, 32], strides = [1, 1]} : vector<8x128xf32> to vector<8x32xf32>
    %251 = arith.negf %250 : vector<8x32xf32>
    %252 = math.exp %251 : vector<8x32xf32>
    %cst_39 = arith.constant 1.000000e+00 : f32
    %253 = vector.broadcast %cst_39 : f32 to vector<8x32xf32>
    %254 = arith.addf %253, %252 : vector<8x32xf32>
    %255 = arith.divf %253, %254 : vector<8x32xf32>
    %256 = vector.extract_strided_slice %243 {offsets = [0, 64], sizes = [8, 32], strides = [1, 1]} : vector<8x128xf32> to vector<8x32xf32>
    %257 = math.tanh %256 : vector<8x32xf32>
    %258 = vector.extract_strided_slice %243 {offsets = [0, 96], sizes = [8, 32], strides = [1, 1]} : vector<8x128xf32> to vector<8x32xf32>
    %259 = arith.negf %258 : vector<8x32xf32>
    %260 = math.exp %259 : vector<8x32xf32>
    %cst_40 = arith.constant 1.000000e+00 : f32
    %261 = vector.broadcast %cst_40 : f32 to vector<8x32xf32>
    %262 = arith.addf %261, %260 : vector<8x32xf32>
    %263 = arith.divf %261, %262 : vector<8x32xf32>
    %264 = arith.mulf %255, %239 : vector<8x32xf32>
    %265 = arith.mulf %249, %257 : vector<8x32xf32>
    %266 = arith.addf %264, %265 : vector<8x32xf32>
    %267 = math.tanh %266 : vector<8x32xf32>
    %268 = arith.mulf %263, %267 : vector<8x32xf32>
    %c6_i32 = arith.constant 6 : i32
    %269 = vector.broadcast %c6_i32 : i32 to vector<8x1xi32>
    %270 = arith.cmpi sgt, %14, %269 : vector<8x1xi32>
    %271 = vector.shape_cast %270 : vector<8x1xi1> to vector<8x1xi1>
    %272 = vector.broadcast %271 : vector<8x1xi1> to vector<8x32xi1>
    %273 = arith.select %272, %268, %236 : vector<8x32xi1>, vector<8x32xf32>
    %274 = arith.truncf %273 : vector<8x32xf32> to vector<8x32xbf16>
    %c0_41 = arith.constant 0 : index
    %c0_42 = arith.constant 0 : index
    %c0_43 = arith.constant 0 : index
    %275 = vector.load %arg2[%c0_41, %c0_42, %c0_43] : memref<1x8x1xi32, #tpu.memory_space<vmem>>, vector<1x8x1xi32>
    %276 = vector.shape_cast %275 : vector<1x8x1xi32> to vector<8x1xi32>
    %277 = tpu.iota {dimensions = array<i32: 1>} : vector<8x32xi32>
    %278 = vector.broadcast %276 : vector<8x1xi32> to vector<8x32xi32>
    %279 = arith.cmpi eq, %277, %278 : vector<8x32xi32>
    %280 = arith.extui %279 : vector<8x32xi1> to vector<8x32xi32>
    %281 = arith.sitofp %280 : vector<8x32xi32> to vector<8x32xf32>
    %282 = arith.truncf %281 : vector<8x32xf32> to vector<8x32xbf16>
    %c0_44 = arith.constant 0 : index
    %c0_45 = arith.constant 0 : index
    %283 = vector.load %arg7[%c0_44, %c0_45] : memref<32x128xbf16, #tpu.memory_space<vmem>>, vector<32x128xbf16>
    %cst_46 = arith.constant dense<0.000000e+00> : vector<8x128xf32>
    %284 = tpu.matmul %282, %283, %cst_46 {dimension_numbers = #tpu.dot_dimension_numbers<[1], [0], [0], [1], [0, 0, 1, 1], [], []>} : vector<8x32xbf16>, vector<32x128xbf16>, vector<8x128xf32> -> vector<8x128xf32>
    %c0_47 = arith.constant 0 : index
    %c0_48 = arith.constant 0 : index
    %285 = vector.load %arg8[%c0_47, %c0_48] : memref<32x128xbf16, #tpu.memory_space<vmem>>, vector<32x128xbf16>
    %cst_49 = arith.constant dense<0.000000e+00> : vector<8x128xf32>
    %286 = tpu.matmul %274, %285, %cst_49 {dimension_numbers = #tpu.dot_dimension_numbers<[1], [0], [0], [1], [0, 0, 1, 1], [], []>} : vector<8x32xbf16>, vector<32x128xbf16>, vector<8x128xf32> -> vector<8x128xf32>
    %287 = arith.addf %284, %286 : vector<8x128xf32>
    %c0_50 = arith.constant 0 : index
    %c0_51 = arith.constant 0 : index
    %288 = vector.load %arg10[%c0_50, %c0_51] : memref<1x128xf32, #tpu.memory_space<vmem>>, vector<1x128xf32>
    %289 = vector.broadcast %288 : vector<1x128xf32> to vector<8x128xf32>
    %290 = arith.addf %287, %289 : vector<8x128xf32>
    %c0_52 = arith.constant 0 : index
    %c0_53 = arith.constant 0 : index
    %291 = vector.load %arg9[%c0_52, %c0_53] : memref<32x128xbf16, #tpu.memory_space<vmem>>, vector<32x128xbf16>
    %cst_54 = arith.constant 0.000000e+00 : f32
    %292 = vector.broadcast %cst_54 : f32 to vector<1x32xf32>
    %cst_55 = arith.constant 0.000000e+00 : f32
    %293 = vector.broadcast %cst_55 : f32 to vector<1x32xf32>
    %294 = vector.extract_strided_slice %290 {offsets = [0, 0], sizes = [1, 128], strides = [1, 1]} : vector<8x128xf32> to vector<1x128xf32>
    %295 = arith.truncf %292 : vector<1x32xf32> to vector<1x32xbf16>
    %cst_56 = arith.constant dense<0.000000e+00> : vector<1x128xf32>
    %296 = tpu.matmul %295, %291, %cst_56 {dimension_numbers = #tpu.dot_dimension_numbers<[1], [0], [0], [1], [0, 0, 1, 1], [], []>} : vector<1x32xbf16>, vector<32x128xbf16>, vector<1x128xf32> -> vector<1x128xf32>
    %297 = arith.addf %294, %296 : vector<1x128xf32>
    %298 = vector.extract_strided_slice %297 {offsets = [0, 0], sizes = [1, 32], strides = [1, 1]} : vector<1x128xf32> to vector<1x32xf32>
    %299 = arith.negf %298 : vector<1x32xf32>
    %300 = math.exp %299 : vector<1x32xf32>
    %cst_57 = arith.constant 1.000000e+00 : f32
    %301 = vector.broadcast %cst_57 : f32 to vector<1x32xf32>
    %302 = arith.addf %301, %300 : vector<1x32xf32>
    %303 = arith.divf %301, %302 : vector<1x32xf32>
    %304 = vector.extract_strided_slice %297 {offsets = [0, 32], sizes = [1, 32], strides = [1, 1]} : vector<1x128xf32> to vector<1x32xf32>
    %305 = arith.negf %304 : vector<1x32xf32>
    %306 = math.exp %305 : vector<1x32xf32>
    %cst_58 = arith.constant 1.000000e+00 : f32
    %307 = vector.broadcast %cst_58 : f32 to vector<1x32xf32>
    %308 = arith.addf %307, %306 : vector<1x32xf32>
    %309 = arith.divf %307, %308 : vector<1x32xf32>
    %310 = vector.extract_strided_slice %297 {offsets = [0, 64], sizes = [1, 32], strides = [1, 1]} : vector<1x128xf32> to vector<1x32xf32>
    %311 = math.tanh %310 : vector<1x32xf32>
    %312 = vector.extract_strided_slice %297 {offsets = [0, 96], sizes = [1, 32], strides = [1, 1]} : vector<1x128xf32> to vector<1x32xf32>
    %313 = arith.negf %312 : vector<1x32xf32>
    %314 = math.exp %313 : vector<1x32xf32>
    %cst_59 = arith.constant 1.000000e+00 : f32
    %315 = vector.broadcast %cst_59 : f32 to vector<1x32xf32>
    %316 = arith.addf %315, %314 : vector<1x32xf32>
    %317 = arith.divf %315, %316 : vector<1x32xf32>
    %318 = arith.mulf %309, %293 : vector<1x32xf32>
    %319 = arith.mulf %303, %311 : vector<1x32xf32>
    %320 = arith.addf %318, %319 : vector<1x32xf32>
    %321 = math.tanh %320 : vector<1x32xf32>
    %322 = arith.mulf %317, %321 : vector<1x32xf32>
    %323 = vector.extract_strided_slice %290 {offsets = [1, 0], sizes = [1, 128], strides = [1, 1]} : vector<8x128xf32> to vector<1x128xf32>
    %324 = arith.truncf %322 : vector<1x32xf32> to vector<1x32xbf16>
    %cst_60 = arith.constant dense<0.000000e+00> : vector<1x128xf32>
    %325 = tpu.matmul %324, %291, %cst_60 {dimension_numbers = #tpu.dot_dimension_numbers<[1], [0], [0], [1], [0, 0, 1, 1], [], []>} : vector<1x32xbf16>, vector<32x128xbf16>, vector<1x128xf32> -> vector<1x128xf32>
    %326 = arith.addf %323, %325 : vector<1x128xf32>
    %327 = vector.extract_strided_slice %326 {offsets = [0, 0], sizes = [1, 32], strides = [1, 1]} : vector<1x128xf32> to vector<1x32xf32>
    %328 = arith.negf %327 : vector<1x32xf32>
    %329 = math.exp %328 : vector<1x32xf32>
    %cst_61 = arith.constant 1.000000e+00 : f32
    %330 = vector.broadcast %cst_61 : f32 to vector<1x32xf32>
    %331 = arith.addf %330, %329 : vector<1x32xf32>
    %332 = arith.divf %330, %331 : vector<1x32xf32>
    %333 = vector.extract_strided_slice %326 {offsets = [0, 32], sizes = [1, 32], strides = [1, 1]} : vector<1x128xf32> to vector<1x32xf32>
    %334 = arith.negf %333 : vector<1x32xf32>
    %335 = math.exp %334 : vector<1x32xf32>
    %cst_62 = arith.constant 1.000000e+00 : f32
    %336 = vector.broadcast %cst_62 : f32 to vector<1x32xf32>
    %337 = arith.addf %336, %335 : vector<1x32xf32>
    %338 = arith.divf %336, %337 : vector<1x32xf32>
    %339 = vector.extract_strided_slice %326 {offsets = [0, 64], sizes = [1, 32], strides = [1, 1]} : vector<1x128xf32> to vector<1x32xf32>
    %340 = math.tanh %339 : vector<1x32xf32>
    %341 = vector.extract_strided_slice %326 {offsets = [0, 96], sizes = [1, 32], strides = [1, 1]} : vector<1x128xf32> to vector<1x32xf32>
    %342 = arith.negf %341 : vector<1x32xf32>
    %343 = math.exp %342 : vector<1x32xf32>
    %cst_63 = arith.constant 1.000000e+00 : f32
    %344 = vector.broadcast %cst_63 : f32 to vector<1x32xf32>
    %345 = arith.addf %344, %343 : vector<1x32xf32>
    %346 = arith.divf %344, %345 : vector<1x32xf32>
    %347 = arith.mulf %338, %320 : vector<1x32xf32>
    %348 = arith.mulf %332, %340 : vector<1x32xf32>
    %349 = arith.addf %347, %348 : vector<1x32xf32>
    %350 = math.tanh %349 : vector<1x32xf32>
    %351 = arith.mulf %346, %350 : vector<1x32xf32>
    %352 = vector.extract_strided_slice %290 {offsets = [2, 0], sizes = [1, 128], strides = [1, 1]} : vector<8x128xf32> to vector<1x128xf32>
    %353 = arith.truncf %351 : vector<1x32xf32> to vector<1x32xbf16>
    %cst_64 = arith.constant dense<0.000000e+00> : vector<1x128xf32>
    %354 = tpu.matmul %353, %291, %cst_64 {dimension_numbers = #tpu.dot_dimension_numbers<[1], [0], [0], [1], [0, 0, 1, 1], [], []>} : vector<1x32xbf16>, vector<32x128xbf16>, vector<1x128xf32> -> vector<1x128xf32>
    %355 = arith.addf %352, %354 : vector<1x128xf32>
    %356 = vector.extract_strided_slice %355 {offsets = [0, 0], sizes = [1, 32], strides = [1, 1]} : vector<1x128xf32> to vector<1x32xf32>
    %357 = arith.negf %356 : vector<1x32xf32>
    %358 = math.exp %357 : vector<1x32xf32>
    %cst_65 = arith.constant 1.000000e+00 : f32
    %359 = vector.broadcast %cst_65 : f32 to vector<1x32xf32>
    %360 = arith.addf %359, %358 : vector<1x32xf32>
    %361 = arith.divf %359, %360 : vector<1x32xf32>
    %362 = vector.extract_strided_slice %355 {offsets = [0, 32], sizes = [1, 32], strides = [1, 1]} : vector<1x128xf32> to vector<1x32xf32>
    %363 = arith.negf %362 : vector<1x32xf32>
    %364 = math.exp %363 : vector<1x32xf32>
    %cst_66 = arith.constant 1.000000e+00 : f32
    %365 = vector.broadcast %cst_66 : f32 to vector<1x32xf32>
    %366 = arith.addf %365, %364 : vector<1x32xf32>
    %367 = arith.divf %365, %366 : vector<1x32xf32>
    %368 = vector.extract_strided_slice %355 {offsets = [0, 64], sizes = [1, 32], strides = [1, 1]} : vector<1x128xf32> to vector<1x32xf32>
    %369 = math.tanh %368 : vector<1x32xf32>
    %370 = vector.extract_strided_slice %355 {offsets = [0, 96], sizes = [1, 32], strides = [1, 1]} : vector<1x128xf32> to vector<1x32xf32>
    %371 = arith.negf %370 : vector<1x32xf32>
    %372 = math.exp %371 : vector<1x32xf32>
    %cst_67 = arith.constant 1.000000e+00 : f32
    %373 = vector.broadcast %cst_67 : f32 to vector<1x32xf32>
    %374 = arith.addf %373, %372 : vector<1x32xf32>
    %375 = arith.divf %373, %374 : vector<1x32xf32>
    %376 = arith.mulf %367, %349 : vector<1x32xf32>
    %377 = arith.mulf %361, %369 : vector<1x32xf32>
    %378 = arith.addf %376, %377 : vector<1x32xf32>
    %379 = math.tanh %378 : vector<1x32xf32>
    %380 = arith.mulf %375, %379 : vector<1x32xf32>
    %381 = vector.extract_strided_slice %290 {offsets = [3, 0], sizes = [1, 128], strides = [1, 1]} : vector<8x128xf32> to vector<1x128xf32>
    %382 = arith.truncf %380 : vector<1x32xf32> to vector<1x32xbf16>
    %cst_68 = arith.constant dense<0.000000e+00> : vector<1x128xf32>
    %383 = tpu.matmul %382, %291, %cst_68 {dimension_numbers = #tpu.dot_dimension_numbers<[1], [0], [0], [1], [0, 0, 1, 1], [], []>} : vector<1x32xbf16>, vector<32x128xbf16>, vector<1x128xf32> -> vector<1x128xf32>
    %384 = arith.addf %381, %383 : vector<1x128xf32>
    %385 = vector.extract_strided_slice %384 {offsets = [0, 0], sizes = [1, 32], strides = [1, 1]} : vector<1x128xf32> to vector<1x32xf32>
    %386 = arith.negf %385 : vector<1x32xf32>
    %387 = math.exp %386 : vector<1x32xf32>
    %cst_69 = arith.constant 1.000000e+00 : f32
    %388 = vector.broadcast %cst_69 : f32 to vector<1x32xf32>
    %389 = arith.addf %388, %387 : vector<1x32xf32>
    %390 = arith.divf %388, %389 : vector<1x32xf32>
    %391 = vector.extract_strided_slice %384 {offsets = [0, 32], sizes = [1, 32], strides = [1, 1]} : vector<1x128xf32> to vector<1x32xf32>
    %392 = arith.negf %391 : vector<1x32xf32>
    %393 = math.exp %392 : vector<1x32xf32>
    %cst_70 = arith.constant 1.000000e+00 : f32
    %394 = vector.broadcast %cst_70 : f32 to vector<1x32xf32>
    %395 = arith.addf %394, %393 : vector<1x32xf32>
    %396 = arith.divf %394, %395 : vector<1x32xf32>
    %397 = vector.extract_strided_slice %384 {offsets = [0, 64], sizes = [1, 32], strides = [1, 1]} : vector<1x128xf32> to vector<1x32xf32>
    %398 = math.tanh %397 : vector<1x32xf32>
    %399 = vector.extract_strided_slice %384 {offsets = [0, 96], sizes = [1, 32], strides = [1, 1]} : vector<1x128xf32> to vector<1x32xf32>
    %400 = arith.negf %399 : vector<1x32xf32>
    %401 = math.exp %400 : vector<1x32xf32>
    %cst_71 = arith.constant 1.000000e+00 : f32
    %402 = vector.broadcast %cst_71 : f32 to vector<1x32xf32>
    %403 = arith.addf %402, %401 : vector<1x32xf32>
    %404 = arith.divf %402, %403 : vector<1x32xf32>
    %405 = arith.mulf %396, %378 : vector<1x32xf32>
    %406 = arith.mulf %390, %398 : vector<1x32xf32>
    %407 = arith.addf %405, %406 : vector<1x32xf32>
    %408 = math.tanh %407 : vector<1x32xf32>
    %409 = arith.mulf %404, %408 : vector<1x32xf32>
    %410 = vector.extract_strided_slice %290 {offsets = [4, 0], sizes = [1, 128], strides = [1, 1]} : vector<8x128xf32> to vector<1x128xf32>
    %411 = arith.truncf %409 : vector<1x32xf32> to vector<1x32xbf16>
    %cst_72 = arith.constant dense<0.000000e+00> : vector<1x128xf32>
    %412 = tpu.matmul %411, %291, %cst_72 {dimension_numbers = #tpu.dot_dimension_numbers<[1], [0], [0], [1], [0, 0, 1, 1], [], []>} : vector<1x32xbf16>, vector<32x128xbf16>, vector<1x128xf32> -> vector<1x128xf32>
    %413 = arith.addf %410, %412 : vector<1x128xf32>
    %414 = vector.extract_strided_slice %413 {offsets = [0, 0], sizes = [1, 32], strides = [1, 1]} : vector<1x128xf32> to vector<1x32xf32>
    %415 = arith.negf %414 : vector<1x32xf32>
    %416 = math.exp %415 : vector<1x32xf32>
    %cst_73 = arith.constant 1.000000e+00 : f32
    %417 = vector.broadcast %cst_73 : f32 to vector<1x32xf32>
    %418 = arith.addf %417, %416 : vector<1x32xf32>
    %419 = arith.divf %417, %418 : vector<1x32xf32>
    %420 = vector.extract_strided_slice %413 {offsets = [0, 32], sizes = [1, 32], strides = [1, 1]} : vector<1x128xf32> to vector<1x32xf32>
    %421 = arith.negf %420 : vector<1x32xf32>
    %422 = math.exp %421 : vector<1x32xf32>
    %cst_74 = arith.constant 1.000000e+00 : f32
    %423 = vector.broadcast %cst_74 : f32 to vector<1x32xf32>
    %424 = arith.addf %423, %422 : vector<1x32xf32>
    %425 = arith.divf %423, %424 : vector<1x32xf32>
    %426 = vector.extract_strided_slice %413 {offsets = [0, 64], sizes = [1, 32], strides = [1, 1]} : vector<1x128xf32> to vector<1x32xf32>
    %427 = math.tanh %426 : vector<1x32xf32>
    %428 = vector.extract_strided_slice %413 {offsets = [0, 96], sizes = [1, 32], strides = [1, 1]} : vector<1x128xf32> to vector<1x32xf32>
    %429 = arith.negf %428 : vector<1x32xf32>
    %430 = math.exp %429 : vector<1x32xf32>
    %cst_75 = arith.constant 1.000000e+00 : f32
    %431 = vector.broadcast %cst_75 : f32 to vector<1x32xf32>
    %432 = arith.addf %431, %430 : vector<1x32xf32>
    %433 = arith.divf %431, %432 : vector<1x32xf32>
    %434 = arith.mulf %425, %407 : vector<1x32xf32>
    %435 = arith.mulf %419, %427 : vector<1x32xf32>
    %436 = arith.addf %434, %435 : vector<1x32xf32>
    %437 = math.tanh %436 : vector<1x32xf32>
    %438 = arith.mulf %433, %437 : vector<1x32xf32>
    %cst_76 = arith.constant 0.000000e+00 : f32
    %439 = vector.broadcast %cst_76 : f32 to vector<3x32xf32>
    %440 = tpu.concatenate %322, %351, %380, %409, %438, %439 in 0 : vector<1x32xf32>, vector<1x32xf32>, vector<1x32xf32>, vector<1x32xf32>, vector<1x32xf32>, vector<3x32xf32> -> vector<8x32xf32>
    %441 = arith.truncf %440 : vector<8x32xf32> to vector<8x32xbf16>
    %c0_77 = arith.constant 0 : index
    %c0_78 = arith.constant 0 : index
    %442 = vector.load %arg11[%c0_77, %c0_78] : memref<32x128xbf16, #tpu.memory_space<vmem>>, vector<32x128xbf16>
    %cst_79 = arith.constant dense<0.000000e+00> : vector<8x128xf32>
    %443 = tpu.matmul %441, %442, %cst_79 {dimension_numbers = #tpu.dot_dimension_numbers<[1], [0], [0], [1], [0, 0, 1, 1], [], []>} : vector<8x32xbf16>, vector<32x128xbf16>, vector<8x128xf32> -> vector<8x128xf32>
    %c0_80 = arith.constant 0 : index
    %c0_81 = arith.constant 0 : index
    %444 = vector.load %arg12[%c0_80, %c0_81] : memref<1x128xf32, #tpu.memory_space<vmem>>, vector<1x128xf32>
    %445 = vector.broadcast %444 : vector<1x128xf32> to vector<8x128xf32>
    %446 = arith.addf %443, %445 : vector<8x128xf32>
    %cst_82 = arith.constant dense<0xFF800000> : vector<8xf32>
    %447 = vector.multi_reduction <maximumf>, %446, %cst_82 [1] : vector<8x128xf32> to vector<8xf32>
    %448 = vector.shape_cast %447 : vector<8xf32> to vector<8x1xf32>
    %449 = vector.broadcast %448 : vector<8x1xf32> to vector<8x128xf32>
    %450 = arith.subf %446, %449 : vector<8x128xf32>
    %451 = math.exp %450 : vector<8x128xf32>
    %cst_83 = arith.constant dense<0.000000e+00> : vector<8xf32>
    %452 = vector.multi_reduction <add>, %451, %cst_83 [1] : vector<8x128xf32> to vector<8xf32>
    %453 = vector.shape_cast %452 : vector<8xf32> to vector<8x1xf32>
    %454 = math.log %453 : vector<8x1xf32>
    %455 = vector.broadcast %454 : vector<8x1xf32> to vector<8x128xf32>
    %456 = arith.subf %450, %455 : vector<8x128xf32>
    %c0_84 = arith.constant 0 : index
    %c0_85 = arith.constant 0 : index
    %c0_86 = arith.constant 0 : index
    %457 = vector.load %arg13[%c0_84, %c0_85, %c0_86] : memref<1x8x128xf32, #tpu.memory_space<vmem>>, vector<1x8x128xf32>
    %458 = vector.shape_cast %457 : vector<1x8x128xf32> to vector<8x128xf32>
    %459 = vector.shape_cast %456 : vector<8x128xf32> to vector<1x8x128xf32>
    tpu.vector_store %arg13[%c0_84, %c0_85, %c0_86], %459 {strides = array<i32>} : memref<1x8x128xf32, #tpu.memory_space<vmem>>, vector<1x8x128xf32>,
    return
  }
  func.func @transform_0(%arg0: i32) -> (i32, i32, i32) {
    %c0_i32 = arith.constant 0 : i32
    %c0_i32_0 = arith.constant 0 : i32
    %c0_i32_1 = arith.constant 0 : i32
    return %arg0, %c0_i32, %c0_i32_0 : i32, i32, i32
  }
  func.func @transform_1(%arg0: i32) -> (i32, i32, i32) {
    %c0_i32 = arith.constant 0 : i32
    %c0_i32_0 = arith.constant 0 : i32
    %c0_i32_1 = arith.constant 0 : i32
    return %arg0, %c0_i32, %c0_i32_0 : i32, i32, i32
  }
  func.func @transform_2(%arg0: i32) -> (i32, i32, i32) {
    %c0_i32 = arith.constant 0 : i32
    %c0_i32_0 = arith.constant 0 : i32
    %c0_i32_1 = arith.constant 0 : i32
    return %arg0, %c0_i32, %c0_i32_0 : i32, i32, i32
  }
  func.func @transform_3(%arg0: i32) -> (i32, i32) {
    %c0_i32 = arith.constant 0 : i32
    %c0_i32_0 = arith.constant 0 : i32
    %c0_i32_1 = arith.constant 0 : i32
    return %c0_i32, %c0_i32_0 : i32, i32
  }
  func.func @transform_4(%arg0: i32) -> (i32, i32) {
    %c0_i32 = arith.constant 0 : i32
    %c0_i32_0 = arith.constant 0 : i32
    %c0_i32_1 = arith.constant 0 : i32
    return %c0_i32, %c0_i32_0 : i32, i32
  }
  func.func @transform_5(%arg0: i32) -> (i32, i32) {
    %c0_i32 = arith.constant 0 : i32
    %c0_i32_0 = arith.constant 0 : i32
    %c0_i32_1 = arith.constant 0 : i32
    return %c0_i32, %c0_i32_0 : i32, i32
  }
  func.func @transform_6(%arg0: i32) -> (i32, i32) {
    %c0_i32 = arith.constant 0 : i32
    %c0_i32_0 = arith.constant 0 : i32
    %c0_i32_1 = arith.constant 0 : i32
    return %c0_i32, %c0_i32_0 : i32, i32
  }
  func.func @transform_7(%arg0: i32) -> (i32, i32) {
    %c0_i32 = arith.constant 0 : i32
    %c0_i32_0 = arith.constant 0 : i32
    %c0_i32_1 = arith.constant 0 : i32
    return %c0_i32, %c0_i32_0 : i32, i32
  }
  func.func @transform_8(%arg0: i32) -> (i32, i32) {
    %c0_i32 = arith.constant 0 : i32
    %c0_i32_0 = arith.constant 0 : i32
    %c0_i32_1 = arith.constant 0 : i32
    return %c0_i32, %c0_i32_0 : i32, i32
  }
  func.func @transform_9(%arg0: i32) -> (i32, i32) {
    %c0_i32 = arith.constant 0 : i32
    %c0_i32_0 = arith.constant 0 : i32
    %c0_i32_1 = arith.constant 0 : i32
    return %c0_i32, %c0_i32_0 : i32, i32
  }
  func.func @transform_10(%arg0: i32) -> (i32, i32) {
    %c0_i32 = arith.constant 0 : i32
    %c0_i32_0 = arith.constant 0 : i32
    %c0_i32_1 = arith.constant 0 : i32
    return %c0_i32, %c0_i32_0 : i32, i32
  }
  func.func @transform_11(%arg0: i32) -> (i32, i32) {
    %c0_i32 = arith.constant 0 : i32
    %c0_i32_0 = arith.constant 0 : i32
    %c0_i32_1 = arith.constant 0 : i32
    return %c0_i32, %c0_i32_0 : i32, i32
  }
  func.func @transform_12(%arg0: i32) -> (i32, i32, i32) {
    %c0_i32 = arith.constant 0 : i32
    %c0_i32_0 = arith.constant 0 : i32
    %c0_i32_1 = arith.constant 0 : i32
    return %arg0, %c0_i32, %c0_i32_0 : i32, i32, i32
  }
}

</mosaic_0001>

<llo_original>
// kernel: lstm_tagger_forward.1
$region0: #{lstm_tagger_forward.1}
  #allocation0 [shape = 'u32[]', space=smem, size = 0x4, offset = 0x4, fixed_abs, tag = 'smem constant byte address 0x4 - core index']
  #allocation1 [shape = 'u32[144,128]{1,0:T(1,128)}', space=vmem, size = 0x12000, scoped, tag = 'internal scratch']
  %s0 = inlined_call_operand.vmem [shape: s32[4,56,1], index: 0, kind: input, shape index: {}]
  %s1 = inlined_call_operand.vmem [shape: s32[4,8,1], index: 1, kind: input, shape index: {}]
  %s2 = inlined_call_operand.vmem [shape: s32[4,8,1], index: 2, kind: input, shape index: {}]
  %s3 = inlined_call_operand.vmem [shape: bf16[32,128], index: 3, kind: input, shape index: {}]
  %s4 = inlined_call_operand.vmem [shape: bf16[32,128], index: 4, kind: input, shape index: {}]
  %s5 = inlined_call_operand.vmem [shape: f32[1,128], index: 5, kind: input, shape index: {}]
  %s6 = inlined_call_operand.vmem [shape: bf16[32,128], index: 6, kind: input, shape index: {}]
  %s7 = inlined_call_operand.vmem [shape: bf16[32,128], index: 7, kind: input, shape index: {}]
  %s8 = inlined_call_operand.vmem [shape: bf16[32,128], index: 8, kind: input, shape index: {}]
  %s9 = inlined_call_operand.vmem [shape: f32[1,128], index: 9, kind: input, shape index: {}]
  %s10 = inlined_call_operand.vmem [shape: bf16[32,128], index: 10, kind: input, shape index: {}]
  %s11 = inlined_call_operand.vmem [shape: f32[1,128], index: 11, kind: input, shape index: {}]
  %s12 = inlined_call_operand.vmem [shape: f32[4,8,128], index: 12, kind: output, shape index: {}]
  %s13 = sld [smem:[#allocation0]]
  $region81: #{lstm_tagger_forward.1} parent=0
    _
  %s15 = ssub.s32 1, %s13
  %s16 = scalar_select 0, %s15, %s13
  loop: start=0, step=1, limit=6
  $region2: #{lstm_tagger_forward.1} parent=0 // loop_pre_header
    _
  $region3: #{lstm_tagger_forward.1} parent=0 // loop_header
    %s18 = sphi 0, %s22
    %p19 = scmp.ge.s32.totalorder %s18, 6
    %s28 = sphi 0, %s30
    %s31 = sphi 0, %s28
    %s32 = sphi 0, %s31
    %s48 = sphi 0, %s32
    %s54 = sphi 0, %s56
    %s57 = sphi 0, %s54
    %s58 = sphi 0, %s57
    %s74 = sphi 0, %s58
    %s80 = sphi 0, %s82
    %s83 = sphi 0, %s80
    %s84 = sphi 0, %s83
    %s100 = sphi 0, %s84
    %s104 = sphi 0, %s104
    %s106 = sphi 0, %s104
    %s107 = sphi 0, %s106
    %s121 = sphi 0, %s107
    %s125 = sphi 0, %s125
    %s127 = sphi 0, %s125
    %s128 = sphi 0, %s127
    %s142 = sphi 0, %s128
    %s146 = sphi 0, %s146
    %s148 = sphi 0, %s146
    %s149 = sphi 0, %s148
    %s163 = sphi 0, %s149
    %s167 = sphi 0, %s167
    %s169 = sphi 0, %s167
    %s170 = sphi 0, %s169
    %s184 = sphi 0, %s170
    %s188 = sphi 0, %s188
    %s190 = sphi 0, %s188
    %s191 = sphi 0, %s190
    %s205 = sphi 0, %s191
    %s209 = sphi 0, %s209
    %s211 = sphi 0, %s209
    %s212 = sphi 0, %s211
    %s226 = sphi 0, %s212
    %s230 = sphi 0, %s230
    %s232 = sphi 0, %s230
    %s233 = sphi 0, %s232
    %s247 = sphi 0, %s233
    %s251 = sphi 0, %s251
    %s253 = sphi 0, %s251
    %s254 = sphi 0, %s253
    %s268 = sphi 0, %s254
    %s272 = sphi 0, %s272
    %s274 = sphi 0, %s272
    %s275 = sphi 0, %s274
    %s289 = sphi 0, %s275
    %s295 = sphi 0, %s297
    %s298 = sphi 0, %s295
    %s299 = sphi 0, %s298
    %s315 = sphi 0, %s299
  $region4: #{lstm_tagger_forward.1} parent=0 // loop_header_branch
    %21 = sbr.rel (%p19) target = $region8
  $region5: #{lstm_tagger_forward.1} parent=0 // loop_body
    %s23 = ssub.s32 %s18, 1
    %s24 = ssub.s32 %s18, 2
    %s25 = sadd.s32 %s18, 1
    %s26 = ssub.s32 %s18, %s25
    %p27 = scmp.eq.s32.totalorder %s26, 0
    %s29 = sadd.s32 %s28, 1
    %s30 = scalar_select %p27, %s28, %s29
    %p33 = pneg %p27
    %p34 = scmp.eq.s32.totalorder %s18, 3
    %p35 = por %p33, %p34
    %p36 = scmp.ne.s32.totalorder %s28, %s31
    %p37 = scmp.eq.s32.totalorder %s18, 0
    %p38 = por %p36, %p37
    %p39 = scmp.ne.s32.totalorder %s28, %s31
    %p40 = scmp.eq.s32.totalorder %s23, 3
    %p41 = por %p39, %p40
    %p42 = scmp.ne.s32.totalorder %s31, %s32
    %p43 = scmp.eq.s32.totalorder %s23, 0
    %p44 = por %p42, %p43
    %p45 = scmp.ne.s32.totalorder %s31, %s32
    %p46 = scmp.eq.s32.totalorder %s24, 3
    %p47 = por %p45, %p46
    %p49 = scmp.ne.s32.totalorder %s32, %s48
    %p50 = scmp.eq.s32.totalorder %s24, 0
    %p51 = por %p49, %p50
    %s52 = ssub.s32 %s18, %s25
    %p53 = scmp.eq.s32.totalorder %s52, 0
    %s55 = sadd.s32 %s54, 1
    %s56 = scalar_select %p53, %s54, %s55
    %p59 = pneg %p53
    %p60 = scmp.eq.s32.totalorder %s18, 3
    %p61 = por %p59, %p60
    %p62 = scmp.ne.s32.totalorder %s54, %s57
    %p63 = scmp.eq.s32.totalorder %s18, 0
    %p64 = por %p62, %p63
    %p65 = scmp.ne.s32.totalorder %s54, %s57
    %p66 = scmp.eq.s32.totalorder %s23, 3
    %p67 = por %p65, %p66
    %p68 = scmp.ne.s32.totalorder %s57, %s58
    %p69 = scmp.eq.s32.totalorder %s23, 0
    %p70 = por %p68, %p69
    %p71 = scmp.ne.s32.totalorder %s57, %s58
    %p72 = scmp.eq.s32.totalorder %s24, 3
    %p73 = por %p71, %p72
    %p75 = scmp.ne.s32.totalorder %s58, %s74
    %p76 = scmp.eq.s32.totalorder %s24, 0
    %p77 = por %p75, %p76
    %s78 = ssub.s32 %s18, %s25
    %p79 = scmp.eq.s32.totalorder %s78, 0
    %s81 = sadd.s32 %s80, 1
    %s82 = scalar_select %p79, %s80, %s81
    %p85 = pneg %p79
    %p86 = scmp.eq.s32.totalorder %s18, 3
    %p87 = por %p85, %p86
    %p88 = scmp.ne.s32.totalorder %s80, %s83
    %p89 = scmp.eq.s32.totalorder %s18, 0
    %p90 = por %p88, %p89
    %p91 = scmp.ne.s32.totalorder %s80, %s83
    %p92 = scmp.eq.s32.totalorder %s23, 3
    %p93 = por %p91, %p92
    %p94 = scmp.ne.s32.totalorder %s83, %s84
    %p95 = scmp.eq.s32.totalorder %s23, 0
    %p96 = por %p94, %p95
    %p97 = scmp.ne.s32.totalorder %s83, %s84
    %p98 = scmp.eq.s32.totalorder %s24, 3
    %p99 = por %p97, %p98
    %p101 = scmp.ne.s32.totalorder %s84, %s100
    %p102 = scmp.eq.s32.totalorder %s24, 0
    %p103 = por %p101, %p102
    %s105 = sadd.s32 %s104, 1
    %p108 = scmp.eq.s32.totalorder %s18, 3
    %p109 = scmp.ne.s32.totalorder %s104, %s106
    %p110 = scmp.eq.s32.totalorder %s18, 0
    %p111 = por %p109, %p110
    %p112 = scmp.ne.s32.totalorder %s104, %s106
    %p113 = scmp.eq.s32.totalorder %s23, 3
    %p114 = por %p112, %p113
    %p115 = scmp.ne.s32.totalorder %s106, %s107
    %p116 = scmp.eq.s32.totalorder %s23, 0
    %p117 = por %p115, %p116
    %p118 = scmp.ne.s32.totalorder %s106, %s107
    %p119 = scmp.eq.s32.totalorder %s24, 3
    %p120 = por %p118, %p119
    %p122 = scmp.ne.s32.totalorder %s107, %s121
    %p123 = scmp.eq.s32.totalorder %s24, 0
    %p124 = por %p122, %p123
    %s126 = sadd.s32 %s125, 1
    %p129 = scmp.eq.s32.totalorder %s18, 3
    %p130 = scmp.ne.s32.totalorder %s125, %s127
    %p131 = scmp.eq.s32.totalorder %s18, 0
    %p132 = por %p130, %p131
    %p133 = scmp.ne.s32.totalorder %s125, %s127
    %p134 = scmp.eq.s32.totalorder %s23, 3
    %p135 = por %p133, %p134
    %p136 = scmp.ne.s32.totalorder %s127, %s128
    %p137 = scmp.eq.s32.totalorder %s23, 0
    %p138 = por %p136, %p137
    %p139 = scmp.ne.s32.totalorder %s127, %s128
    %p140 = scmp.eq.s32.totalorder %s24, 3
    %p141 = por %p139, %p140
    %p143 = scmp.ne.s32.totalorder %s128, %s142
    %p144 = scmp.eq.s32.totalorder %s24, 0
    %p145 = por %p143, %p144
    %s147 = sadd.s32 %s146, 1
    %p150 = scmp.eq.s32.totalorder %s18, 3
    %p151 = scmp.ne.s32.totalorder %s146, %s148
    %p152 = scmp.eq.s32.totalorder %s18, 0
    %p153 = por %p151, %p152
    %p154 = scmp.ne.s32.totalorder %s146, %s148
    %p155 = scmp.eq.s32.totalorder %s23, 3
    %p156 = por %p154, %p155
    %p157 = scmp.ne.s32.totalorder %s148, %s149
    %p158 = scmp.eq.s32.totalorder %s23, 0
    %p159 = por %p157, %p158
    %p160 = scmp.ne.s32.totalorder %s148, %s149
    %p161 = scmp.eq.s32.totalorder %s24, 3
    %p162 = por %p160, %p161
    %p164 = scmp.ne.s32.totalorder %s149, %s163
    %p165 = scmp.eq.s32.totalorder %s24, 0
    %p166 = por %p164, %p165
    %s168 = sadd.s32 %s167, 1
    %p171 = scmp.eq.s32.totalorder %s18, 3
    %p172 = scmp.ne.s32.totalorder %s167, %s169
    %p173 = scmp.eq.s32.totalorder %s18, 0
    %p174 = por %p172, %p173
    %p175 = scmp.ne.s32.totalorder %s167, %s169
    %p176 = scmp.eq.s32.totalorder %s23, 3
    %p177 = por %p175, %p176
    %p178 = scmp.ne.s32.totalorder %s169, %s170
    %p179 = scmp.eq.s32.totalorder %s23, 0
    %p180 = por %p178, %p179
    %p181 = scmp.ne.s32.totalorder %s169, %s170
    %p182 = scmp.eq.s32.totalorder %s24, 3
    %p183 = por %p181, %p182
    %p185 = scmp.ne.s32.totalorder %s170, %s184
    %p186 = scmp.eq.s32.totalorder %s24, 0
    %p187 = por %p185, %p186
    %s189 = sadd.s32 %s188, 1
    %p192 = scmp.eq.s32.totalorder %s18, 3
    %p193 = scmp.ne.s32.totalorder %s188, %s190
    %p194 = scmp.eq.s32.totalorder %s18, 0
    %p195 = por %p193, %p194
    %p196 = scmp.ne.s32.totalorder %s188, %s190
    %p197 = scmp.eq.s32.totalorder %s23, 3
    %p198 = por %p196, %p197
    %p199 = scmp.ne.s32.totalorder %s190, %s191
    %p200 = scmp.eq.s32.totalorder %s23, 0
    %p201 = por %p199, %p200
    %p202 = scmp.ne.s32.totalorder %s190, %s191
    %p203 = scmp.eq.s32.totalorder %s24, 3
    %p204 = por %p202, %p203
    %p206 = scmp.ne.s32.totalorder %s191, %s205
    %p207 = scmp.eq.s32.totalorder %s24, 0
    %p208 = por %p206, %p207
    %s210 = sadd.s32 %s209, 1
    %p213 = scmp.eq.s32.totalorder %s18, 3
    %p214 = scmp.ne.s32.totalorder %s209, %s211
    %p215 = scmp.eq.s32.totalorder %s18, 0
    %p216 = por %p214, %p215
    %p217 = scmp.ne.s32.totalorder %s209, %s211
    %p218 = scmp.eq.s32.totalorder %s23, 3
    %p219 = por %p217, %p218
    %p220 = scmp.ne.s32.totalorder %s211, %s212
    %p221 = scmp.eq.s32.totalorder %s23, 0
    %p222 = por %p220, %p221
    %p223 = scmp.ne.s32.totalorder %s211, %s212
    %p224 = scmp.eq.s32.totalorder %s24, 3
    %p225 = por %p223, %p224
    %p227 = scmp.ne.s32.totalorder %s212, %s226
    %p228 = scmp.eq.s32.totalorder %s24, 0
    %p229 = por %p227, %p228
    %s231 = sadd.s32 %s230, 1
    %p234 = scmp.eq.s32.totalorder %s18, 3
    %p235 = scmp.ne.s32.totalorder %s230, %s232
    %p236 = scmp.eq.s32.totalorder %s18, 0
    %p237 = por %p235, %p236
    %p238 = scmp.ne.s32.totalorder %s230, %s232
    %p239 = scmp.eq.s32.totalorder %s23, 3
    %p240 = por %p238, %p239
    %p241 = scmp.ne.s32.totalorder %s232, %s233
    %p242 = scmp.eq.s32.totalorder %s23, 0
    %p243 = por %p241, %p242
    %p244 = scmp.ne.s32.totalorder %s232, %s233
    %p245 = scmp.eq.s32.totalorder %s24, 3
    %p246 = por %p244, %p245
    %p248 = scmp.ne.s32.totalorder %s233, %s247
    %p249 = scmp.eq.s32.totalorder %s24, 0
    %p250 = por %p248, %p249
    %s252 = sadd.s32 %s251, 1
    %p255 = scmp.eq.s32.totalorder %s18, 3
    %p256 = scmp.ne.s32.totalorder %s251, %s253
    %p257 = scmp.eq.s32.totalorder %s18, 0
    %p258 = por %p256, %p257
    %p259 = scmp.ne.s32.totalorder %s251, %s253
    %p260 = scmp.eq.s32.totalorder %s23, 3
    %p261 = por %p259, %p260
    %p262 = scmp.ne.s32.totalorder %s253, %s254
    %p263 = scmp.eq.s32.totalorder %s23, 0
    %p264 = por %p262, %p263
    %p265 = scmp.ne.s32.totalorder %s253, %s254
    %p266 = scmp.eq.s32.totalorder %s24, 3
    %p267 = por %p265, %p266
    %p269 = scmp.ne.s32.totalorder %s254, %s268
    %p270 = scmp.eq.s32.totalorder %s24, 0
    %p271 = por %p269, %p270
    %s273 = sadd.s32 %s272, 1
    %p276 = scmp.eq.s32.totalorder %s18, 3
    %p277 = scmp.ne.s32.totalorder %s272, %s274
    %p278 = scmp.eq.s32.totalorder %s18, 0
    %p279 = por %p277, %p278
    %p280 = scmp.ne.s32.totalorder %s272, %s274
    %p281 = scmp.eq.s32.totalorder %s23, 3
    %p282 = por %p280, %p281
    %p283 = scmp.ne.s32.totalorder %s274, %s275
    %p284 = scmp.eq.s32.totalorder %s23, 0
    %p285 = por %p283, %p284
    %p286 = scmp.ne.s32.totalorder %s274, %s275
    %p287 = scmp.eq.s32.totalorder %s24, 3
    %p288 = por %p286, %p287
    %p290 = scmp.ne.s32.totalorder %s275, %s289
    %p291 = scmp.eq.s32.totalorder %s24, 0
    %p292 = por %p290, %p291
    %s293 = ssub.s32 %s18, %s25
    %p294 = scmp.eq.s32.totalorder %s293, 0
    %s296 = sadd.s32 %s295, 1
    %s297 = scalar_select %p294, %s295, %s296
    %p300 = pneg %p294
    %p301 = scmp.eq.s32.totalorder %s18, 3
    %p302 = por %p300, %p301
    %p303 = scmp.ne.s32.totalorder %s295, %s298
    %p304 = scmp.eq.s32.totalorder %s18, 0
    %p305 = por %p303, %p304
    %p306 = scmp.ne.s32.totalorder %s295, %s298
    %p307 = scmp.eq.s32.totalorder %s23, 3
    %p308 = por %p306, %p307
    %p309 = scmp.ne.s32.totalorder %s298, %s299
    %p310 = scmp.eq.s32.totalorder %s23, 0
    %p311 = por %p309, %p310
    %p312 = scmp.ne.s32.totalorder %s298, %s299
    %p313 = scmp.eq.s32.totalorder %s24, 3
    %p314 = por %p312, %p313
    %p316 = scmp.ne.s32.totalorder %s299, %s315
    %p317 = scmp.eq.s32.totalorder %s24, 0
    %p318 = por %p316, %p317
    %p319 = scmp.le.s32.totalorder 1, %s18
    %p320 = scmp.lt.s32.totalorder %s18, 5
    %p321 = pnand %p319, %p320
    %p322 = pneg %p321
    // Predicated region
    $region9: #{lstm_tagger_forward.1} parent=5 // pred_check
      _
    $region10: #{lstm_tagger_forward.1} parent=5 // pred_check_branch
      %324 = sbr.rel (%p321) target = $region12
    $region11: #{lstm_tagger_forward.1} parent=5 // pred_region
      %s325 = ssub.s32 %s18, 1
      // Predicated region
      $region13: #{lstm_tagger_forward.1} parent=11 // pred_check
        %p326 = pneg %p117
      $region14: #{lstm_tagger_forward.1} parent=11 // pred_check_branch
        %328 = sbr.rel (%p326) target = $region16
      $region15: #{lstm_tagger_forward.1} parent=11 // pred_region
        _
      $region16: #{lstm_tagger_forward.1} parent=11 // pred_fallthru
        _
      // Predicated region
      $region17: #{lstm_tagger_forward.1} parent=11 // pred_check
        %p329 = pneg %p138
      $region18: #{lstm_tagger_forward.1} parent=11 // pred_check_branch
        %331 = sbr.rel (%p329) target = $region20
      $region19: #{lstm_tagger_forward.1} parent=11 // pred_region
        _
      $region20: #{lstm_tagger_forward.1} parent=11 // pred_fallthru
        _
      // Predicated region
      $region21: #{lstm_tagger_forward.1} parent=11 // pred_check
        %p332 = pneg %p159
      $region22: #{lstm_tagger_forward.1} parent=11 // pred_check_branch
        %334 = sbr.rel (%p332) target = $region24
      $region23: #{lstm_tagger_forward.1} parent=11 // pred_region
        _
      $region24: #{lstm_tagger_forward.1} parent=11 // pred_fallthru
        _
      // Predicated region
      $region25: #{lstm_tagger_forward.1} parent=11 // pred_check
        %p335 = pneg %p180
      $region26: #{lstm_tagger_forward.1} parent=11 // pred_check_branch
        %337 = sbr.rel (%p335) target = $region28
      $region27: #{lstm_tagger_forward.1} parent=11 // pred_region
        _
      $region28: #{lstm_tagger_forward.1} parent=11 // pred_fallthru
        _
      // Predicated region
      $region29: #{lstm_tagger_forward.1} parent=11 // pred_check
        %p338 = pneg %p201
      $region30: #{lstm_tagger_forward.1} parent=11 // pred_check_branch
        %340 = sbr.rel (%p338) target = $region32
      $region31: #{lstm_tagger_forward.1} parent=11 // pred_region
        _
      $region32: #{lstm_tagger_forward.1} parent=11 // pred_fallthru
        _
      // Predicated region
      $region33: #{lstm_tagger_forward.1} parent=11 // pred_check
        %p341 = pneg %p222
      $region34: #{lstm_tagger_forward.1} parent=11 // pred_check_branch
        %343 = sbr.rel (%p341) target = $region36
      $region35: #{lstm_tagger_forward.1} parent=11 // pred_region
        _
      $region36: #{lstm_tagger_forward.1} parent=11 // pred_fallthru
        _
      // Predicated region
      $region37: #{lstm_tagger_forward.1} parent=11 // pred_check
        %p344 = pneg %p243
      $region38: #{lstm_tagger_forward.1} parent=11 // pred_check_branch
        %346 = sbr.rel (%p344) target = $region40
      $region39: #{lstm_tagger_forward.1} parent=11 // pred_region
        _
      $region40: #{lstm_tagger_forward.1} parent=11 // pred_fallthru
        _
      // Predicated region
      $region41: #{lstm_tagger_forward.1} parent=11 // pred_check
        %p347 = pneg %p264
      $region42: #{lstm_tagger_forward.1} parent=11 // pred_check_branch
        %349 = sbr.rel (%p347) target = $region44
      $region43: #{lstm_tagger_forward.1} parent=11 // pred_region
        _
      $region44: #{lstm_tagger_forward.1} parent=11 // pred_fallthru
        _
      // Predicated region
      $region45: #{lstm_tagger_forward.1} parent=11 // pred_check
        %p350 = pneg %p285
      $region46: #{lstm_tagger_forward.1} parent=11 // pred_check_branch
        %352 = sbr.rel (%p350) target = $region48
      $region47: #{lstm_tagger_forward.1} parent=11 // pred_region
        _
      $region48: #{lstm_tagger_forward.1} parent=11 // pred_fallthru
        _
    $region12: #{lstm_tagger_forward.1} parent=5 // pred_fallthru
      _
    %p353 = scmp.lt.s32.totalorder %s18, 4
    // Predicated region
    $region49: #{lstm_tagger_forward.1} parent=5 // pred_check
      %p354 = pneg %p353
    $region50: #{lstm_tagger_forward.1} parent=5 // pred_check_branch
      %356 = sbr.rel (%p354) target = $region52
    $region51: #{lstm_tagger_forward.1} parent=5 // pred_region
      // Predicated region
      $region53: #{lstm_tagger_forward.1} parent=51 // pred_check
        %p357 = pneg %p38
      $region54: #{lstm_tagger_forward.1} parent=51 // pred_check_branch
        %359 = sbr.rel (%p357) target = $region56
      $region55: #{lstm_tagger_forward.1} parent=51 // pred_region
        %p360 = scmp.lt.s32.totalorder %s18, 3
        %s361 = scalar_select %p360, %s18, 3
        %s362 = smul.addr %s361, 7
        %s363 = smul.addr %s362, 8
        %s364 = scalar_lea.vmem %s0, %s363
      $region56: #{lstm_tagger_forward.1} parent=51 // pred_fallthru
        _
      // Predicated region
      $region57: #{lstm_tagger_forward.1} parent=51 // pred_check
        %p365 = pneg %p64
      $region58: #{lstm_tagger_forward.1} parent=51 // pred_check_branch
        %367 = sbr.rel (%p365) target = $region60
      $region59: #{lstm_tagger_forward.1} parent=51 // pred_region
        %p368 = scmp.lt.s32.totalorder %s18, 3
        %s369 = scalar_select %p368, %s18, 3
        %s370 = smul.addr %s369, 8
        %s371 = scalar_lea.vmem %s1, %s370
      $region60: #{lstm_tagger_forward.1} parent=51 // pred_fallthru
        _
      // Predicated region
      $region61: #{lstm_tagger_forward.1} parent=51 // pred_check
        %p372 = pneg %p90
      $region62: #{lstm_tagger_forward.1} parent=51 // pred_check_branch
        %374 = sbr.rel (%p372) target = $region64
      $region63: #{lstm_tagger_forward.1} parent=51 // pred_region
        %p375 = scmp.lt.s32.totalorder %s18, 3
        %s376 = scalar_select %p375, %s18, 3
        %s377 = smul.addr %s376, 8
        %s378 = scalar_lea.vmem %s2, %s377
      $region64: #{lstm_tagger_forward.1} parent=51 // pred_fallthru
        _
    $region52: #{lstm_tagger_forward.1} parent=5 // pred_fallthru
      _
    %p379 = scmp.le.s32.totalorder 1, %s18
    %p380 = scmp.lt.s32.totalorder %s18, 5
    %p381 = pnand %p379, %p380
    %p382 = pneg %p381
    // Predicated region
    $region65: #{lstm_tagger_forward.1} parent=5 // pred_check
      _
    $region66: #{lstm_tagger_forward.1} parent=5 // pred_check_branch
      %384 = sbr.rel (%p381) target = $region68
    $region67: #{lstm_tagger_forward.1} parent=5 // pred_region
      %s385 = ssub.s32 %s18, 1
      %p386 = scmp.lt.s32.totalorder %s23, 3
      %s387 = scalar_select %p386, %s23, 3
      %s388 = smul.addr %s387, 7
      %s389 = smul.addr %s388, 8
      %s390 = scalar_lea.vmem %s0, %s389
      %p391 = pneg %p44
      %p392 = pneg %p41
      %p393 = scmp.lt.s32.totalorder %s23, 3
      %s394 = scalar_select %p393, %s23, 3
      %s395 = smul.addr %s394, 8
      %s396 = scalar_lea.vmem %s1, %s395
      %p397 = pneg %p70
      %p398 = pneg %p67
      %p399 = scmp.lt.s32.totalorder %s23, 3
      %s400 = scalar_select %p399, %s23, 3
      %s401 = smul.addr %s400, 8
      %s402 = scalar_lea.vmem %s2, %s401
      %p403 = pneg %p96
      %p404 = pneg %p93
      %p405 = pneg %p117
      %p406 = pneg %p114
      %p407 = pneg %p138
      %p408 = pneg %p135
      %p409 = pneg %p159
      %p410 = pneg %p156
      %p411 = pneg %p180
      %p412 = pneg %p177
      %p413 = pneg %p201
      %p414 = pneg %p198
      %p415 = pneg %p222
      %p416 = pneg %p219
      %p417 = pneg %p243
      %p418 = pneg %p240
      %p419 = pneg %p264
      %p420 = pneg %p261
      %p421 = pneg %p285
      %p422 = pneg %p282
      %p423 = pneg %p311
      %p424 = pneg %p308
      %p425 = scmp.lt.s32.totalorder %s23, 3
      %s426 = scalar_select %p425, %s23, 3
      %s427 = smul.addr %s426, 8
      %s428 = scalar_lea.vmem %s12, %s427
      %p429 = scmp.lt.s32.totalorder %s23, 3
      %s430 = scalar_select %p429, %s23, 3
      %s431 = smul.addr %s430, 7
      %s432 = smul.addr %s431, 8
      %s433 = scalar_lea.vmem %s0, %s432
      %p434 = scmp.lt.s32.totalorder %s23, 3
      %s435 = scalar_select %p434, %s23, 3
      %s436 = smul.addr %s435, 8
      %s437 = scalar_lea.vmem %s1, %s436
      %p438 = scmp.lt.s32.totalorder %s23, 3
      %s439 = scalar_select %p438, %s23, 3
      %s440 = smul.addr %s439, 8
      %s441 = scalar_lea.vmem %s2, %s440
      %p442 = scmp.lt.s32.totalorder %s23, 3
      %s443 = scalar_select %p442, %s23, 3
      %s444 = smul.addr %s443, 8
      %s445 = scalar_lea.vmem %s12, %s444
      %v447 = vld [vmem:[%s433] sm:$0xff]
      %v448 = vld [vmem:[%s433 + $0x8] sm:$0xff]
      %v449 = vld [vmem:[%s433 + $0x10] sm:$0xff]
      %v450 = vld [vmem:[%s433 + $0x18] sm:$0xff]
      %v451 = vld [vmem:[%s433 + $0x20] sm:$0xff]
      %v452 = vld [vmem:[%s433 + $0x28] sm:$0xff]
      %v453 = vld [vmem:[%s433 + $0x30] sm:$0xff]
      %v454 = vlaneseq
      %v455 = vand.u32 %v454, 127
      %456 = vset.pattern.permute.xlu0 0
      %457 = vperm.xlu0 %456, %v447
      %v458 = vpop.permute.xlu0 %457
      %459 = vset.pattern.permute.xlu0 0
      %460 = vperm.xlu0 %459, %v448
      %v461 = vpop.permute.xlu0 %460
      %462 = vset.pattern.permute.xlu0 0
      %463 = vperm.xlu0 %462, %v449
      %v464 = vpop.permute.xlu0 %463
      %465 = vset.pattern.permute.xlu0 0
      %466 = vperm.xlu0 %465, %v450
      %v467 = vpop.permute.xlu0 %466
      %468 = vset.pattern.permute.xlu0 0
      %469 = vperm.xlu0 %468, %v451
      %v470 = vpop.permute.xlu0 %469
      %471 = vset.pattern.permute.xlu0 0
      %472 = vperm.xlu0 %471, %v452
      %v473 = vpop.permute.xlu0 %472
      %474 = vset.pattern.permute.xlu0 0
      %475 = vperm.xlu0 %474, %v453
      %v476 = vpop.permute.xlu0 %475
      %vm477 = vcmp.eq.s32.totalorder %v455, %v458
      %vm478 = vcmp.eq.s32.totalorder %v455, %v461
      %vm479 = vcmp.eq.s32.totalorder %v455, %v464
      %vm480 = vcmp.eq.s32.totalorder %v455, %v467
      %vm481 = vcmp.eq.s32.totalorder %v455, %v470
      %vm482 = vcmp.eq.s32.totalorder %v455, %v473
      %vm483 = vcmp.eq.s32.totalorder %v455, %v476
      %v484 = vsel %vm477, 1, 0
      %v485 = vsel %vm478, 1, 0
      %v486 = vsel %vm479, 1, 0
      %v487 = vsel %vm480, 1, 0
      %v488 = vsel %vm481, 1, 0
      %v489 = vsel %vm482, 1, 0
      %v490 = vsel %vm483, 1, 0
      %v491 = vcvt.s32.f32 %v484
      %v492 = vcvt.s32.f32 %v485
      %v493 = vcvt.s32.f32 %v486
      %v494 = vcvt.s32.f32 %v487
      %v495 = vcvt.s32.f32 %v488
      %v496 = vcvt.s32.f32 %v489
      %v497 = vcvt.s32.f32 %v490
      %v498 = vpack.c.bf16 %v492, %v491
      %v499 = vpack.c.bf16 %v494, %v493
      %v500 = vpack.c.bf16 %v496, %v495
      %v501 = vpack.c.bf16 %v497, %v497
      %v502 = vld [vmem:[%s3] sm:$0xf]
      %v503 = vld [vmem:[%s3 + $0x4] sm:$0xf]
      %v504 = vld [vmem:[%s3 + $0x8] sm:$0xf]
      %v505 = vld [vmem:[%s3 + $0xc] sm:$0xf]
      %v506 = vld [vmem:[%s5] sm:$0x1]
      %v508 = vlaneseq
      %v509 = vshrl.u32 %v508, 7
      %v510 = vsub.s32 0, %v509
      %v511 = vrot.slane %v506, %v510
      %v517 = vunpack.c.l.b16 %v502
      %v518 = vunpack.c.l.b16 %v503
      %v519 = vunpack.c.l.b16 %v504
      %v520 = vunpack.c.l.b16 %v505
      %v521 = vpack.c.b16 %v518, %v517
      %v522 = vpack.c.b16 %v520, %v519
      %vm525 = vcmask 261120
      %v527 = vsel %vm525, %v498, 0
      %v530 = vsel %vm525, %v499, 0
      %v533 = vsel %vm525, %v500, 0
      %v536 = vsel %vm525, %v501, 0
      %538 = vmatprep.subr.bf16.mxu0 0
      %539 = vmatpush1.bf16.msra.mxu0 %v521
      %540 = vmatprep.subr.bf16.mxu0 0
      %541 = vmatpush1.bf16.msra.mxu0 %v522
      %542 = vmatprep.subr.bf16.mxu0 0
      %543 = vmatpush1.bf16.msra.mxu0 0
      %544 = vmatprep.subr.bf16.mxu0 0
      %545 = vmatpush1.bf16.msra.mxu0 0
      %546 = vmatprep.subr.bf16.mxu0 0
      %547 = vmatpush1.bf16.msra.mxu0 0
      %548 = vmatprep.subr.bf16.mxu0 0
      %549 = vmatpush1.bf16.msra.mxu0 0
      %550 = vmatprep.subr.bf16.mxu0 0
      %551 = vmatpush1.bf16.msra.mxu0 0
      %552 = vmatprep.subr.bf16.mxu0 0
      %553 = vmatpush1.bf16.msra.mxu0 0
      %554 = vmatprep.subr.bf16.mxu0 0
      %555 = vmatpush1.bf16.msra.mxu0 0
      %556 = vmatprep.subr.bf16.mxu0 0
      %557 = vmatpush1.bf16.msra.mxu0 0
      %558 = vmatprep.subr.bf16.mxu0 0
      %559 = vmatpush1.bf16.msra.mxu0 0
      %560 = vmatprep.subr.bf16.mxu0 0
      %561 = vmatpush1.bf16.msra.mxu0 0
      %562 = vmatprep.subr.bf16.mxu0 0
      %563 = vmatpush1.bf16.msra.mxu0 0
      %564 = vmatprep.subr.bf16.mxu0 0
      %565 = vmatpush1.bf16.msra.mxu0 0
      %566 = vmatprep.subr.bf16.mxu0 0
      %567 = vmatpush1.bf16.msra.mxu0 0
      %568 = vmatprep.subr.bf16.mxu0 0
      %569 = vmatpush1.bf16.msra.mxu0 0
      %570 = vmatprep.mubr.bf16.mxu0 0
      %571 = vmatmul.mubr.bf16.gmra.mrb[0].mxu0 %v527
      %v572 = vpop.f32.mrb[0].mxu0
      %v573 = vadd.f32 %v511, %v572
      %v574 = vpop.f32.mrb[0].mxu0
      %v575 = vpop.f32.mrb[0].mxu0
      %v576 = vadd.f32 %v511, %v575
      %v577 = vpop.f32.mrb[0].mxu0
      %578 = vmatprep.mubr.bf16.mxu0 0
      %579 = vmatmul.mubr.bf16.gmra.mrb[0].mxu0 %v530
      %v580 = vpop.f32.mrb[0].mxu0
      %v581 = vadd.f32 %v511, %v580
      %v582 = vpop.f32.mrb[0].mxu0
      %v583 = vpop.f32.mrb[0].mxu0
      %v584 = vadd.f32 %v511, %v583
      %v585 = vpop.f32.mrb[0].mxu0
      %586 = vmatprep.mubr.bf16.mxu0 0
      %587 = vmatmul.mubr.bf16.gmra.mrb[0].mxu0 %v533
      %v588 = vpop.f32.mrb[0].mxu0
      %v589 = vadd.f32 %v511, %v588
      %v590 = vpop.f32.mrb[0].mxu0
      %v591 = vpop.f32.mrb[0].mxu0
      %v592 = vadd.f32 %v511, %v591
      %v593 = vpop.f32.mrb[0].mxu0
      %594 = vmatprep.mubr.bf16.mxu0 0
      %595 = vmatmul.mubr.bf16.gmra.mrb[0].mxu0 %v536
      %v596 = vpop.f32.mrb[0].mxu0
      %v597 = vadd.f32 %v511, %v596
      %v598 = vpop.f32.mrb[0].mxu0
      %v599 = vpop.f32.mrb[0].mxu0
      %v600 = vpop.f32.mrb[0].mxu0
      %601 = vdwg.mxu0
      %v602 = vld [vmem:[%s441] sm:$0xff]
      %v603 = vld [vmem:[%s4] sm:$0xf]
      %v604 = vld [vmem:[%s4 + $0x4] sm:$0xf]
      %v605 = vld [vmem:[%s4 + $0x8] sm:$0xf]
      %v606 = vld [vmem:[%s4 + $0xc] sm:$0xf]
      %v611 = vunpack.c.l.b16 %v603
      %v612 = vunpack.c.l.b16 %v604
      %v613 = vunpack.c.l.b16 %v605
      %v614 = vunpack.c.l.b16 %v606
      %v615 = vpack.c.b16 %v612, %v611
      %v616 = vpack.c.b16 %v614, %v613
      %v620 = vsel %vm525, 0, 0
      %622 = vmatprep.subr.bf16.mxu0 0
      %623 = vmatpush1.bf16.msra.mxu0 %v615
      %624 = vmatprep.subr.bf16.mxu0 0
      %625 = vmatpush1.bf16.msra.mxu0 %v616
      %626 = vmatprep.subr.bf16.mxu0 0
      %627 = vmatpush1.bf16.msra.mxu0 0
      %628 = vmatprep.subr.bf16.mxu0 0
      %629 = vmatpush1.bf16.msra.mxu0 0
      %630 = vmatprep.subr.bf16.mxu0 0
      %631 = vmatpush1.bf16.msra.mxu0 0
      %632 = vmatprep.subr.bf16.mxu0 0
      %633 = vmatpush1.bf16.msra.mxu0 0
      %634 = vmatprep.subr.bf16.mxu0 0
      %635 = vmatpush1.bf16.msra.mxu0 0
      %636 = vmatprep.subr.bf16.mxu0 0
      %637 = vmatpush1.bf16.msra.mxu0 0
      %638 = vmatprep.subr.bf16.mxu0 0
      %639 = vmatpush1.bf16.msra.mxu0 0
      %640 = vmatprep.subr.bf16.mxu0 0
      %641 = vmatpush1.bf16.msra.mxu0 0
      %642 = vmatprep.subr.bf16.mxu0 0
      %643 = vmatpush1.bf16.msra.mxu0 0
      %644 = vmatprep.subr.bf16.mxu0 0
      %645 = vmatpush1.bf16.msra.mxu0 0
      %646 = vmatprep.subr.bf16.mxu0 0
      %647 = vmatpush1.bf16.msra.mxu0 0
      %648 = vmatprep.subr.bf16.mxu0 0
      %649 = vmatpush1.bf16.msra.mxu0 0
      %650 = vmatprep.subr.bf16.mxu0 0
      %651 = vmatpush1.bf16.msra.mxu0 0
      %652 = vmatprep.subr.bf16.mxu0 0
      %653 = vmatpush1.bf16.msra.mxu0 0
      %654 = vmatprep.mubr.bf16.mxu0 0
      %655 = vmatmul.mubr.bf16.gmra.mrb[0].mxu0 %v620
      %v656 = vpop.f32.mrb[0].mxu0
      %v657 = vadd.f32 0.0, %v656
      %v658 = vpop.f32.mrb[0].mxu0
      %v659 = vpop.f32.mrb[0].mxu0
      %v660 = vpop.f32.mrb[0].mxu0
      %661 = vdwg.mxu0
      %v662 = vadd.f32 %v573, %v657
      %v663 = vxor.u32 %v662, 2147483648
      %v664 = vmul.f32 %v663, 1.442695
      %v665 = vpow.pop %v664
      %v666 = vadd.f32 %v665, 1.0
      %v667 = vrcp.pop %v666
      %v668 = vmul.f32 1.0, %v667
      %v669 = vtanh.pop %v662
      %v670 = vmul.f32 %v668, 0.0
      %672 = vrot.lane.b32.xlu0 %v669, 64
      %v673 = vpop.permute.xlu0 %672
      %v675 = vmul.f32 %v668, %v673
      %677 = vrot.lane.b32.xlu0 %v675, 32
      %v678 = vpop.permute.xlu0 %677
      %v680 = vadd.f32 %v670, %v678
      %v681 = vtanh.pop %v680
      %683 = vrot.lane.b32.xlu0 %v681, 64
      %v684 = vpop.permute.xlu0 %683
      %v686 = vmul.f32 %v668, %v684
      %vm687 = vcmp.gt.s32.totalorder %v602, 0
      %v688 = vsel %vm687, 1, 0
      %689 = vset.pattern.permute.xlu0 0
      %690 = vperm.xlu0 %689, %v688
      %v691 = vpop.permute.xlu0 %690
      %vm692 = vcmp.eq.s32.totalorder %v691, 1
      %v693 = vsel %vm692, %v686, 0.0
      %v694 = vsel %vm692, %v680, 0.0
      %v695 = vpack.c.bf16 %v693, %v693
      %697 = vrot.lane.b32.xlu0 %v695, 32
      %v698 = vpop.permute.xlu0 %697
      %v700 = vsel %vm525, %v698, 0
      %702 = vmatprep.subr.bf16.mxu0 0
      %703 = vmatpush1.bf16.msra.mxu0 %v615
      %704 = vmatprep.subr.bf16.mxu0 0
      %705 = vmatpush1.bf16.msra.mxu0 %v616
      %706 = vmatprep.subr.bf16.mxu0 0
      %707 = vmatpush1.bf16.msra.mxu0 0
      %708 = vmatprep.subr.bf16.mxu0 0
      %709 = vmatpush1.bf16.msra.mxu0 0
      %710 = vmatprep.subr.bf16.mxu0 0
      %711 = vmatpush1.bf16.msra.mxu0 0
      %712 = vmatprep.subr.bf16.mxu0 0
      %713 = vmatpush1.bf16.msra.mxu0 0
      %714 = vmatprep.subr.bf16.mxu0 0
      %715 = vmatpush1.bf16.msra.mxu0 0
      %716 = vmatprep.subr.bf16.mxu0 0
      %717 = vmatpush1.bf16.msra.mxu0 0
      %718 = vmatprep.subr.bf16.mxu0 0
      %719 = vmatpush1.bf16.msra.mxu0 0
      %720 = vmatprep.subr.bf16.mxu0 0
      %721 = vmatpush1.bf16.msra.mxu0 0
      %722 = vmatprep.subr.bf16.mxu0 0
      %723 = vmatpush1.bf16.msra.mxu0 0
      %724 = vmatprep.subr.bf16.mxu0 0
      %725 = vmatpush1.bf16.msra.mxu0 0
      %726 = vmatprep.subr.bf16.mxu0 0
      %727 = vmatpush1.bf16.msra.mxu0 0
      %728 = vmatprep.subr.bf16.mxu0 0
      %729 = vmatpush1.bf16.msra.mxu0 0
      %730 = vmatprep.subr.bf16.mxu0 0
      %731 = vmatpush1.bf16.msra.mxu0 0
      %732 = vmatprep.subr.bf16.mxu0 0
      %733 = vmatpush1.bf16.msra.mxu0 0
      %734 = vmatprep.mubr.bf16.mxu0 0
      %735 = vmatmul.mubr.bf16.gmra.mrb[0].mxu0 %v700
      %v736 = vpop.f32.mrb[0].mxu0
      %v737 = vadd.f32 0.0, %v736
      %v738 = vpop.f32.mrb[0].mxu0
      %v739 = vpop.f32.mrb[0].mxu0
      %v740 = vpop.f32.mrb[0].mxu0
      %741 = vdwg.mxu0
      %v742 = vadd.f32 %v576, %v737
      %v743 = vxor.u32 %v742, 2147483648
      %v744 = vmul.f32 %v743, 1.442695
      %v745 = vpow.pop %v744
      %v746 = vadd.f32 %v745, 1.0
      %v747 = vrcp.pop %v746
      %v748 = vmul.f32 1.0, %v747
      %v749 = vtanh.pop %v742
      %v750 = vmul.f32 %v748, %v694
      %752 = vrot.lane.b32.xlu0 %v749, 64
      %v753 = vpop.permute.xlu0 %752
      %v755 = vmul.f32 %v748, %v753
      %757 = vrot.lane.b32.xlu0 %v755, 32
      %v758 = vpop.permute.xlu0 %757
      %v760 = vadd.f32 %v750, %v758
      %v761 = vtanh.pop %v760
      %763 = vrot.lane.b32.xlu0 %v761, 64
      %v764 = vpop.permute.xlu0 %763
      %v766 = vmul.f32 %v748, %v764
      %vm767 = vcmp.gt.s32.totalorder %v602, 1
      %v768 = vsel %vm767, 1, 0
      %769 = vset.pattern.permute.xlu0 0
      %770 = vperm.xlu0 %769, %v768
      %v771 = vpop.permute.xlu0 %770
      %vm772 = vcmp.eq.s32.totalorder %v771, 1
      %v773 = vsel %vm772, %v766, %v693
      %v774 = vsel %vm772, %v760, %v694
      %v775 = vpack.c.bf16 %v773, %v773
      %777 = vrot.lane.b32.xlu0 %v775, 32
      %v778 = vpop.permute.xlu0 %777
      %v780 = vsel %vm525, %v778, 0
      %782 = vmatprep.subr.bf16.mxu0 0
      %783 = vmatpush1.bf16.msra.mxu0 %v615
      %784 = vmatprep.subr.bf16.mxu0 0
      %785 = vmatpush1.bf16.msra.mxu0 %v616
      %786 = vmatprep.subr.bf16.mxu0 0
      %787 = vmatpush1.bf16.msra.mxu0 0
      %788 = vmatprep.subr.bf16.mxu0 0
      %789 = vmatpush1.bf16.msra.mxu0 0
      %790 = vmatprep.subr.bf16.mxu0 0
      %791 = vmatpush1.bf16.msra.mxu0 0
      %792 = vmatprep.subr.bf16.mxu0 0
      %793 = vmatpush1.bf16.msra.mxu0 0
      %794 = vmatprep.subr.bf16.mxu0 0
      %795 = vmatpush1.bf16.msra.mxu0 0
      %796 = vmatprep.subr.bf16.mxu0 0
      %797 = vmatpush1.bf16.msra.mxu0 0
      %798 = vmatprep.subr.bf16.mxu0 0
      %799 = vmatpush1.bf16.msra.mxu0 0
      %800 = vmatprep.subr.bf16.mxu0 0
      %801 = vmatpush1.bf16.msra.mxu0 0
      %802 = vmatprep.subr.bf16.mxu0 0
      %803 = vmatpush1.bf16.msra.mxu0 0
      %804 = vmatprep.subr.bf16.mxu0 0
      %805 = vmatpush1.bf16.msra.mxu0 0
      %806 = vmatprep.subr.bf16.mxu0 0
      %807 = vmatpush1.bf16.msra.mxu0 0
      %808 = vmatprep.subr.bf16.mxu0 0
      %809 = vmatpush1.bf16.msra.mxu0 0
      %810 = vmatprep.subr.bf16.mxu0 0
      %811 = vmatpush1.bf16.msra.mxu0 0
      %812 = vmatprep.subr.bf16.mxu0 0
      %813 = vmatpush1.bf16.msra.mxu0 0
      %814 = vmatprep.mubr.bf16.mxu0 0
      %815 = vmatmul.mubr.bf16.gmra.mrb[0].mxu0 %v780
      %v816 = vpop.f32.mrb[0].mxu0
      %v817 = vadd.f32 0.0, %v816
      %v818 = vpop.f32.mrb[0].mxu0
      %v819 = vpop.f32.mrb[0].mxu0
      %v820 = vpop.f32.mrb[0].mxu0
      %821 = vdwg.mxu0
      %v822 = vadd.f32 %v581, %v817
      %v823 = vxor.u32 %v822, 2147483648
      %v824 = vmul.f32 %v823, 1.442695
      %v825 = vpow.pop %v824
      %v826 = vadd.f32 %v825, 1.0
      %v827 = vrcp.pop %v826
      %v828 = vmul.f32 1.0, %v827
      %v829 = vtanh.pop %v822
      %v830 = vmul.f32 %v828, %v774
      %832 = vrot.lane.b32.xlu0 %v829, 64
      %v833 = vpop.permute.xlu0 %832
      %v835 = vmul.f32 %v828, %v833
      %837 = vrot.lane.b32.xlu0 %v835, 32
      %v838 = vpop.permute.xlu0 %837
      %v840 = vadd.f32 %v830, %v838
      %v841 = vtanh.pop %v840
      %843 = vrot.lane.b32.xlu0 %v841, 64
      %v844 = vpop.permute.xlu0 %843
      %v846 = vmul.f32 %v828, %v844
      %vm847 = vcmp.gt.s32.totalorder %v602, 2
      %v848 = vsel %vm847, 1, 0
      %849 = vset.pattern.permute.xlu0 0
      %850 = vperm.xlu0 %849, %v848
      %v851 = vpop.permute.xlu0 %850
      %vm852 = vcmp.eq.s32.totalorder %v851, 1
      %v853 = vsel %vm852, %v846, %v773
      %v854 = vsel %vm852, %v840, %v774
      %v855 = vpack.c.bf16 %v853, %v853
      %857 = vrot.lane.b32.xlu0 %v855, 32
      %v858 = vpop.permute.xlu0 %857
      %v860 = vsel %vm525, %v858, 0
      %862 = vmatprep.subr.bf16.mxu0 0
      %863 = vmatpush1.bf16.msra.mxu0 %v615
      %864 = vmatprep.subr.bf16.mxu0 0
      %865 = vmatpush1.bf16.msra.mxu0 %v616
      %866 = vmatprep.subr.bf16.mxu0 0
      %867 = vmatpush1.bf16.msra.mxu0 0
      %868 = vmatprep.subr.bf16.mxu0 0
      %869 = vmatpush1.bf16.msra.mxu0 0
      %870 = vmatprep.subr.bf16.mxu0 0
      %871 = vmatpush1.bf16.msra.mxu0 0
      %872 = vmatprep.subr.bf16.mxu0 0
      %873 = vmatpush1.bf16.msra.mxu0 0
      %874 = vmatprep.subr.bf16.mxu0 0
      %875 = vmatpush1.bf16.msra.mxu0 0
      %876 = vmatprep.subr.bf16.mxu0 0
      %877 = vmatpush1.bf16.msra.mxu0 0
      %878 = vmatprep.subr.bf16.mxu0 0
      %879 = vmatpush1.bf16.msra.mxu0 0
      %880 = vmatprep.subr.bf16.mxu0 0
      %881 = vmatpush1.bf16.msra.mxu0 0
      %882 = vmatprep.subr.bf16.mxu0 0
      %883 = vmatpush1.bf16.msra.mxu0 0
      %884 = vmatprep.subr.bf16.mxu0 0
      %885 = vmatpush1.bf16.msra.mxu0 0
      %886 = vmatprep.subr.bf16.mxu0 0
      %887 = vmatpush1.bf16.msra.mxu0 0
      %888 = vmatprep.subr.bf16.mxu0 0
      %889 = vmatpush1.bf16.msra.mxu0 0
      %890 = vmatprep.subr.bf16.mxu0 0
      %891 = vmatpush1.bf16.msra.mxu0 0
      %892 = vmatprep.subr.bf16.mxu0 0
      %893 = vmatpush1.bf16.msra.mxu0 0
      %894 = vmatprep.mubr.bf16.mxu0 0
      %895 = vmatmul.mubr.bf16.gmra.mrb[0].mxu0 %v860
      %v896 = vpop.f32.mrb[0].mxu0
      %v897 = vadd.f32 0.0, %v896
      %v898 = vpop.f32.mrb[0].mxu0
      %v899 = vpop.f32.mrb[0].mxu0
      %v900 = vpop.f32.mrb[0].mxu0
      %901 = vdwg.mxu0
      %v902 = vadd.f32 %v584, %v897
      %v903 = vxor.u32 %v902, 2147483648
      %v904 = vmul.f32 %v903, 1.442695
      %v905 = vpow.pop %v904
      %v906 = vadd.f32 %v905, 1.0
      %v907 = vrcp.pop %v906
      %v908 = vmul.f32 1.0, %v907
      %v909 = vtanh.pop %v902
      %v910 = vmul.f32 %v908, %v854
      %912 = vrot.lane.b32.xlu0 %v909, 64
      %v913 = vpop.permute.xlu0 %912
      %v915 = vmul.f32 %v908, %v913
      %917 = vrot.lane.b32.xlu0 %v915, 32
      %v918 = vpop.permute.xlu0 %917
      %v920 = vadd.f32 %v910, %v918
      %v921 = vtanh.pop %v920
      %923 = vrot.lane.b32.xlu0 %v921, 64
      %v924 = vpop.permute.xlu0 %923
      %v926 = vmul.f32 %v908, %v924
      %vm927 = vcmp.gt.s32.totalorder %v602, 3
      %v928 = vsel %vm927, 1, 0
      %929 = vset.pattern.permute.xlu0 0
      %930 = vperm.xlu0 %929, %v928
      %v931 = vpop.permute.xlu0 %930
      %vm932 = vcmp.eq.s32.totalorder %v931, 1
      %v933 = vsel %vm932, %v926, %v853
      %v934 = vsel %vm932, %v920, %v854
      %v935 = vpack.c.bf16 %v933, %v933
      %937 = vrot.lane.b32.xlu0 %v935, 32
      %v938 = vpop.permute.xlu0 %937
      %v940 = vsel %vm525, %v938, 0
      %942 = vmatprep.subr.bf16.mxu0 0
      %943 = vmatpush1.bf16.msra.mxu0 %v615
      %944 = vmatprep.subr.bf16.mxu0 0
      %945 = vmatpush1.bf16.msra.mxu0 %v616
      %946 = vmatprep.subr.bf16.mxu0 0
      %947 = vmatpush1.bf16.msra.mxu0 0
      %948 = vmatprep.subr.bf16.mxu0 0
      %949 = vmatpush1.bf16.msra.mxu0 0
      %950 = vmatprep.subr.bf16.mxu0 0
      %951 = vmatpush1.bf16.msra.mxu0 0
      %952 = vmatprep.subr.bf16.mxu0 0
      %953 = vmatpush1.bf16.msra.mxu0 0
      %954 = vmatprep.subr.bf16.mxu0 0
      %955 = vmatpush1.bf16.msra.mxu0 0
      %956 = vmatprep.subr.bf16.mxu0 0
      %957 = vmatpush1.bf16.msra.mxu0 0
      %958 = vmatprep.subr.bf16.mxu0 0
      %959 = vmatpush1.bf16.msra.mxu0 0
      %960 = vmatprep.subr.bf16.mxu0 0
      %961 = vmatpush1.bf16.msra.mxu0 0
      %962 = vmatprep.subr.bf16.mxu0 0
      %963 = vmatpush1.bf16.msra.mxu0 0
      %964 = vmatprep.subr.bf16.mxu0 0
      %965 = vmatpush1.bf16.msra.mxu0 0
      %966 = vmatprep.subr.bf16.mxu0 0
      %967 = vmatpush1.bf16.msra.mxu0 0
      %968 = vmatprep.subr.bf16.mxu0 0
      %969 = vmatpush1.bf16.msra.mxu0 0
      %970 = vmatprep.subr.bf16.mxu0 0
      %971 = vmatpush1.bf16.msra.mxu0 0
      %972 = vmatprep.subr.bf16.mxu0 0
      %973 = vmatpush1.bf16.msra.mxu0 0
      %974 = vmatprep.mubr.bf16.mxu0 0
      %975 = vmatmul.mubr.bf16.gmra.mrb[0].mxu0 %v940
      %v976 = vpop.f32.mrb[0].mxu0
      %v977 = vadd.f32 0.0, %v976
      %v978 = vpop.f32.mrb[0].mxu0
      %v979 = vpop.f32.mrb[0].mxu0
      %v980 = vpop.f32.mrb[0].mxu0
      %981 = vdwg.mxu0
      %v982 = vadd.f32 %v589, %v977
      %v983 = vxor.u32 %v982, 2147483648
      %v984 = vmul.f32 %v983, 1.442695
      %v985 = vpow.pop %v984
      %v986 = vadd.f32 %v985, 1.0
      %v987 = vrcp.pop %v986
      %v988 = vmul.f32 1.0, %v987
      %v989 = vtanh.pop %v982
      %v990 = vmul.f32 %v988, %v934
      %992 = vrot.lane.b32.xlu0 %v989, 64
      %v993 = vpop.permute.xlu0 %992
      %v995 = vmul.f32 %v988, %v993
      %997 = vrot.lane.b32.xlu0 %v995, 32
      %v998 = vpop.permute.xlu0 %997
      %v1000 = vadd.f32 %v990, %v998
      %v1001 = vtanh.pop %v1000
      %1003 = vrot.lane.b32.xlu0 %v1001, 64
      %v1004 = vpop.permute.xlu0 %1003
      %v1006 = vmul.f32 %v988, %v1004
      %vm1007 = vcmp.gt.s32.totalorder %v602, 4
      %v1008 = vsel %vm1007, 1, 0
      %1009 = vset.pattern.permute.xlu0 0
      %1010 = vperm.xlu0 %1009, %v1008
      %v1011 = vpop.permute.xlu0 %1010
      %vm1012 = vcmp.eq.s32.totalorder %v1011, 1
      %v1013 = vsel %vm1012, %v1006, %v933
      %v1014 = vsel %vm1012, %v1000, %v934
      %v1015 = vpack.c.bf16 %v1013, %v1013
      %1017 = vrot.lane.b32.xlu0 %v1015, 32
      %v1018 = vpop.permute.xlu0 %1017
      %v1020 = vsel %vm525, %v1018, 0
      %1022 = vmatprep.subr.bf16.mxu0 0
      %1023 = vmatpush1.bf16.msra.mxu0 %v615
      %1024 = vmatprep.subr.bf16.mxu0 0
      %1025 = vmatpush1.bf16.msra.mxu0 %v616
      %1026 = vmatprep.subr.bf16.mxu0 0
      %1027 = vmatpush1.bf16.msra.mxu0 0
      %1028 = vmatprep.subr.bf16.mxu0 0
      %1029 = vmatpush1.bf16.msra.mxu0 0
      %1030 = vmatprep.subr.bf16.mxu0 0
      %1031 = vmatpush1.bf16.msra.mxu0 0
      %1032 = vmatprep.subr.bf16.mxu0 0
      %1033 = vmatpush1.bf16.msra.mxu0 0
      %1034 = vmatprep.subr.bf16.mxu0 0
      %1035 = vmatpush1.bf16.msra.mxu0 0
      %1036 = vmatprep.subr.bf16.mxu0 0
      %1037 = vmatpush1.bf16.msra.mxu0 0
      %1038 = vmatprep.subr.bf16.mxu0 0
      %1039 = vmatpush1.bf16.msra.mxu0 0
      %1040 = vmatprep.subr.bf16.mxu0 0
      %1041 = vmatpush1.bf16.msra.mxu0 0
      %1042 = vmatprep.subr.bf16.mxu0 0
      %1043 = vmatpush1.bf16.msra.mxu0 0
      %1044 = vmatprep.subr.bf16.mxu0 0
      %1045 = vmatpush1.bf16.msra.mxu0 0
      %1046 = vmatprep.subr.bf16.mxu0 0
      %1047 = vmatpush1.bf16.msra.mxu0 0
      %1048 = vmatprep.subr.bf16.mxu0 0
      %1049 = vmatpush1.bf16.msra.mxu0 0
      %1050 = vmatprep.subr.bf16.mxu0 0
      %1051 = vmatpush1.bf16.msra.mxu0 0
      %1052 = vmatprep.subr.bf16.mxu0 0
      %1053 = vmatpush1.bf16.msra.mxu0 0
      %1054 = vmatprep.mubr.bf16.mxu0 0
      %1055 = vmatmul.mubr.bf16.gmra.mrb[0].mxu0 %v1020
      %v1056 = vpop.f32.mrb[0].mxu0
      %v1057 = vadd.f32 0.0, %v1056
      %v1058 = vpop.f32.mrb[0].mxu0
      %v1059 = vpop.f32.mrb[0].mxu0
      %v1060 = vpop.f32.mrb[0].mxu0
      %1061 = vdwg.mxu0
      %v1062 = vadd.f32 %v592, %v1057
      %v1063 = vxor.u32 %v1062, 2147483648
      %v1064 = vmul.f32 %v1063, 1.442695
      %v1065 = vpow.pop %v1064
      %v1066 = vadd.f32 %v1065, 1.0
      %v1067 = vrcp.pop %v1066
      %v1068 = vmul.f32 1.0, %v1067
      %v1069 = vtanh.pop %v1062
      %v1070 = vmul.f32 %v1068, %v1014
      %1072 = vrot.lane.b32.xlu0 %v1069, 64
      %v1073 = vpop.permute.xlu0 %1072
      %v1075 = vmul.f32 %v1068, %v1073
      %1077 = vrot.lane.b32.xlu0 %v1075, 32
      %v1078 = vpop.permute.xlu0 %1077
      %v1080 = vadd.f32 %v1070, %v1078
      %v1081 = vtanh.pop %v1080
      %1083 = vrot.lane.b32.xlu0 %v1081, 64
      %v1084 = vpop.permute.xlu0 %1083
      %v1086 = vmul.f32 %v1068, %v1084
      %vm1087 = vcmp.gt.s32.totalorder %v602, 5
      %v1088 = vsel %vm1087, 1, 0
      %1089 = vset.pattern.permute.xlu0 0
      %1090 = vperm.xlu0 %1089, %v1088
      %v1091 = vpop.permute.xlu0 %1090
      %vm1092 = vcmp.eq.s32.totalorder %v1091, 1
      %v1093 = vsel %vm1092, %v1086, %v1013
      %v1094 = vsel %vm1092, %v1080, %v1014
      %v1095 = vpack.c.bf16 %v1093, %v1093
      %1097 = vrot.lane.b32.xlu0 %v1095, 32
      %v1098 = vpop.permute.xlu0 %1097
      %v1100 = vsel %vm525, %v1098, 0
      %1102 = vmatprep.subr.bf16.mxu0 0
      %1103 = vmatpush1.bf16.msra.mxu0 %v615
      %1104 = vmatprep.subr.bf16.mxu0 0
      %1105 = vmatpush1.bf16.msra.mxu0 %v616
      %1106 = vmatprep.subr.bf16.mxu0 0
      %1107 = vmatpush1.bf16.msra.mxu0 0
      %1108 = vmatprep.subr.bf16.mxu0 0
      %1109 = vmatpush1.bf16.msra.mxu0 0
      %1110 = vmatprep.subr.bf16.mxu0 0
      %1111 = vmatpush1.bf16.msra.mxu0 0
      %1112 = vmatprep.subr.bf16.mxu0 0
      %1113 = vmatpush1.bf16.msra.mxu0 0
      %1114 = vmatprep.subr.bf16.mxu0 0
      %1115 = vmatpush1.bf16.msra.mxu0 0
      %1116 = vmatprep.subr.bf16.mxu0 0
      %1117 = vmatpush1.bf16.msra.mxu0 0
      %1118 = vmatprep.subr.bf16.mxu0 0
      %1119 = vmatpush1.bf16.msra.mxu0 0
      %1120 = vmatprep.subr.bf16.mxu0 0
      %1121 = vmatpush1.bf16.msra.mxu0 0
      %1122 = vmatprep.subr.bf16.mxu0 0
      %1123 = vmatpush1.bf16.msra.mxu0 0
      %1124 = vmatprep.subr.bf16.mxu0 0
      %1125 = vmatpush1.bf16.msra.mxu0 0
      %1126 = vmatprep.subr.bf16.mxu0 0
      %1127 = vmatpush1.bf16.msra.mxu0 0
      %1128 = vmatprep.subr.bf16.mxu0 0
      %1129 = vmatpush1.bf16.msra.mxu0 0
      %1130 = vmatprep.subr.bf16.mxu0 0
      %1131 = vmatpush1.bf16.msra.mxu0 0
      %1132 = vmatprep.subr.bf16.mxu0 0
      %1133 = vmatpush1.bf16.msra.mxu0 0
      %1134 = vmatprep.mubr.bf16.mxu0 0
      %1135 = vmatmul.mubr.bf16.gmra.mrb[0].mxu0 %v1100
      %v1136 = vpop.f32.mrb[0].mxu0
      %v1137 = vadd.f32 0.0, %v1136
      %v1138 = vpop.f32.mrb[0].mxu0
      %v1139 = vpop.f32.mrb[0].mxu0
      %v1140 = vpop.f32.mrb[0].mxu0
      %1141 = vdwg.mxu0
      %v1142 = vadd.f32 %v597, %v1137
      %v1143 = vxor.u32 %v1142, 2147483648
      %v1144 = vmul.f32 %v1143, 1.442695
      %v1145 = vpow.pop %v1144
      %v1146 = vadd.f32 %v1145, 1.0
      %v1147 = vrcp.pop %v1146
      %v1148 = vmul.f32 1.0, %v1147
      %v1149 = vtanh.pop %v1142
      %v1150 = vmul.f32 %v1148, %v1094
      %1152 = vrot.lane.b32.xlu0 %v1149, 64
      %v1153 = vpop.permute.xlu0 %1152
      %v1155 = vmul.f32 %v1148, %v1153
      %1157 = vrot.lane.b32.xlu0 %v1155, 32
      %v1158 = vpop.permute.xlu0 %1157
      %v1160 = vadd.f32 %v1150, %v1158
      %v1161 = vtanh.pop %v1160
      %1163 = vrot.lane.b32.xlu0 %v1161, 64
      %v1164 = vpop.permute.xlu0 %1163
      %v1166 = vmul.f32 %v1148, %v1164
      %vm1167 = vcmp.gt.s32.totalorder %v602, 6
      %v1168 = vsel %vm1167, 1, 0
      %1169 = vset.pattern.permute.xlu0 0
      %1170 = vperm.xlu0 %1169, %v1168
      %v1171 = vpop.permute.xlu0 %1170
      %vm1172 = vcmp.eq.s32.totalorder %v1171, 1
      %v1173 = vsel %vm1172, %v1166, %v1093
      %v1174 = vpack.c.bf16 %v1173, %v1173
      %v1175 = vld [vmem:[%s437] sm:$0xff]
      %1176 = vset.pattern.permute.xlu0 0
      %1177 = vperm.xlu0 %1176, %v1175
      %v1178 = vpop.permute.xlu0 %1177
      %vm1179 = vcmp.eq.s32.totalorder %v455, %v1178
      %v1180 = vsel %vm1179, 1, 0
      %v1181 = vcvt.s32.f32 %v1180
      %v1182 = vpack.c.bf16 %v1181, %v1181
      %v1183 = vld [vmem:[%s6] sm:$0xf]
      %v1184 = vld [vmem:[%s6 + $0x4] sm:$0xf]
      %v1185 = vld [vmem:[%s6 + $0x8] sm:$0xf]
      %v1186 = vld [vmem:[%s6 + $0xc] sm:$0xf]
      %v1187 = vld [vmem:[%s7] sm:$0xf]
      %v1188 = vld [vmem:[%s7 + $0x4] sm:$0xf]
      %v1189 = vld [vmem:[%s7 + $0x8] sm:$0xf]
      %v1190 = vld [vmem:[%s7 + $0xc] sm:$0xf]
      %1192 = vrot.lane.b32.xlu0 %v1174, 32
      %v1193 = vpop.permute.xlu0 %1192
      %v1198 = vunpack.c.l.b16 %v1187
      %v1199 = vunpack.c.l.b16 %v1188
      %v1200 = vunpack.c.l.b16 %v1189
      %v1201 = vunpack.c.l.b16 %v1190
      %v1202 = vpack.c.b16 %v1199, %v1198
      %v1203 = vpack.c.b16 %v1201, %v1200
      %v1207 = vsel %vm525, %v1193, 0
      %1209 = vmatprep.subr.bf16.mxu0 0
      %1210 = vmatpush1.bf16.msra.mxu0 %v1202
      %1211 = vmatprep.subr.bf16.mxu0 0
      %1212 = vmatpush1.bf16.msra.mxu0 %v1203
      %1213 = vmatprep.subr.bf16.mxu0 0
      %1214 = vmatpush1.bf16.msra.mxu0 0
      %1215 = vmatprep.subr.bf16.mxu0 0
      %1216 = vmatpush1.bf16.msra.mxu0 0
      %1217 = vmatprep.subr.bf16.mxu0 0
      %1218 = vmatpush1.bf16.msra.mxu0 0
      %1219 = vmatprep.subr.bf16.mxu0 0
      %1220 = vmatpush1.bf16.msra.mxu0 0
      %1221 = vmatprep.subr.bf16.mxu0 0
      %1222 = vmatpush1.bf16.msra.mxu0 0
      %1223 = vmatprep.subr.bf16.mxu0 0
      %1224 = vmatpush1.bf16.msra.mxu0 0
      %1225 = vmatprep.subr.bf16.mxu0 0
      %1226 = vmatpush1.bf16.msra.mxu0 0
      %1227 = vmatprep.subr.bf16.mxu0 0
      %1228 = vmatpush1.bf16.msra.mxu0 0
      %1229 = vmatprep.subr.bf16.mxu0 0
      %1230 = vmatpush1.bf16.msra.mxu0 0
      %1231 = vmatprep.subr.bf16.mxu0 0
      %1232 = vmatpush1.bf16.msra.mxu0 0
      %1233 = vmatprep.subr.bf16.mxu0 0
      %1234 = vmatpush1.bf16.msra.mxu0 0
      %1235 = vmatprep.subr.bf16.mxu0 0
      %1236 = vmatpush1.bf16.msra.mxu0 0
      %1237 = vmatprep.subr.bf16.mxu0 0
      %1238 = vmatpush1.bf16.msra.mxu0 0
      %1239 = vmatprep.subr.bf16.mxu0 0
      %1240 = vmatpush1.bf16.msra.mxu0 0
      %1241 = vmatprep.mubr.bf16.mxu0 0
      %1242 = vmatmul.mubr.bf16.gmra.mrb[0].mxu0 %v1207
      %v1243 = vpop.f32.mrb[0].mxu0
      %v1244 = vadd.f32 0.0, %v1243
      %v1245 = vpop.f32.mrb[0].mxu0
      %v1246 = vpop.f32.mrb[0].mxu0
      %v1247 = vpop.f32.mrb[0].mxu0
      %1248 = vdwg.mxu0
      %v1253 = vunpack.c.l.b16 %v1183
      %v1254 = vunpack.c.l.b16 %v1184
      %v1255 = vunpack.c.l.b16 %v1185
      %v1256 = vunpack.c.l.b16 %v1186
      %v1257 = vpack.c.b16 %v1254, %v1253
      %v1258 = vpack.c.b16 %v1256, %v1255
      %v1262 = vsel %vm525, %v1182, 0
      %1264 = vmatprep.subr.bf16.mxu0 0
      %1265 = vmatpush1.bf16.msra.mxu0 %v1257
      %1266 = vmatprep.subr.bf16.mxu0 0
      %1267 = vmatpush1.bf16.msra.mxu0 %v1258
      %1268 = vmatprep.subr.bf16.mxu0 0
      %1269 = vmatpush1.bf16.msra.mxu0 0
      %1270 = vmatprep.subr.bf16.mxu0 0
      %1271 = vmatpush1.bf16.msra.mxu0 0
      %1272 = vmatprep.subr.bf16.mxu0 0
      %1273 = vmatpush1.bf16.msra.mxu0 0
      %1274 = vmatprep.subr.bf16.mxu0 0
      %1275 = vmatpush1.bf16.msra.mxu0 0
      %1276 = vmatprep.subr.bf16.mxu0 0
      %1277 = vmatpush1.bf16.msra.mxu0 0
      %1278 = vmatprep.subr.bf16.mxu0 0
      %1279 = vmatpush1.bf16.msra.mxu0 0
      %1280 = vmatprep.subr.bf16.mxu0 0
      %1281 = vmatpush1.bf16.msra.mxu0 0
      %1282 = vmatprep.subr.bf16.mxu0 0
      %1283 = vmatpush1.bf16.msra.mxu0 0
      %1284 = vmatprep.subr.bf16.mxu0 0
      %1285 = vmatpush1.bf16.msra.mxu0 0
      %1286 = vmatprep.subr.bf16.mxu0 0
      %1287 = vmatpush1.bf16.msra.mxu0 0
      %1288 = vmatprep.subr.bf16.mxu0 0
      %1289 = vmatpush1.bf16.msra.mxu0 0
      %1290 = vmatprep.subr.bf16.mxu0 0
      %1291 = vmatpush1.bf16.msra.mxu0 0
      %1292 = vmatprep.subr.bf16.mxu0 0
      %1293 = vmatpush1.bf16.msra.mxu0 0
      %1294 = vmatprep.subr.bf16.mxu0 0
      %1295 = vmatpush1.bf16.msra.mxu0 0
      %1296 = vmatprep.mubr.bf16.mxu0 0
      %1297 = vmatmul.mubr.bf16.gmra.mrb[0].mxu0 %v1262
      %v1298 = vpop.f32.mrb[0].mxu0
      %v1299 = vadd.f32 %v1244, %v1298
      %v1300 = vpop.f32.mrb[0].mxu0
      %v1301 = vpop.f32.mrb[0].mxu0
      %v1302 = vpop.f32.mrb[0].mxu0
      %1303 = vdwg.mxu0
      %v1304 = vld [vmem:[%s9] sm:$0x1]
      %v1306 = vlaneseq
      %v1307 = vshrl.u32 %v1306, 7
      %v1308 = vsub.s32 0, %v1307
      %v1309 = vrot.slane %v1304, %v1308
      %v1311 = vadd.f32 %v1299, %v1309
      %v1312 = vld [vmem:[%s8] sm:$0xf]
      %v1313 = vld [vmem:[%s8 + $0x4] sm:$0xf]
      %v1314 = vld [vmem:[%s8 + $0x8] sm:$0xf]
      %v1315 = vld [vmem:[%s8 + $0xc] sm:$0xf]
      %v1320 = vunpack.c.l.b16 %v1312
      %v1321 = vunpack.c.l.b16 %v1313
      %v1322 = vunpack.c.l.b16 %v1314
      %v1323 = vunpack.c.l.b16 %v1315
      %v1324 = vpack.c.b16 %v1321, %v1320
      %v1325 = vpack.c.b16 %v1323, %v1322
      %1328 = vmatprep.subr.bf16.mxu0 0
      %1329 = vmatpush1.bf16.msra.mxu0 %v1324
      %1330 = vmatprep.subr.bf16.mxu0 0
      %1331 = vmatpush1.bf16.msra.mxu0 %v1325
      %1332 = vmatprep.subr.bf16.mxu0 0
      %1333 = vmatpush1.bf16.msra.mxu0 0
      %1334 = vmatprep.subr.bf16.mxu0 0
      %1335 = vmatpush1.bf16.msra.mxu0 0
      %1336 = vmatprep.subr.bf16.mxu0 0
      %1337 = vmatpush1.bf16.msra.mxu0 0
      %1338 = vmatprep.subr.bf16.mxu0 0
      %1339 = vmatpush1.bf16.msra.mxu0 0
      %1340 = vmatprep.subr.bf16.mxu0 0
      %1341 = vmatpush1.bf16.msra.mxu0 0
      %1342 = vmatprep.subr.bf16.mxu0 0
      %1343 = vmatpush1.bf16.msra.mxu0 0
      %1344 = vmatprep.subr.bf16.mxu0 0
      %1345 = vmatpush1.bf16.msra.mxu0 0
      %1346 = vmatprep.subr.bf16.mxu0 0
      %1347 = vmatpush1.bf16.msra.mxu0 0
      %1348 = vmatprep.subr.bf16.mxu0 0
      %1349 = vmatpush1.bf16.msra.mxu0 0
      %1350 = vmatprep.subr.bf16.mxu0 0
      %1351 = vmatpush1.bf16.msra.mxu0 0
      %1352 = vmatprep.subr.bf16.mxu0 0
      %1353 = vmatpush1.bf16.msra.mxu0 0
      %1354 = vmatprep.subr.bf16.mxu0 0
      %1355 = vmatpush1.bf16.msra.mxu0 0
      %1356 = vmatprep.subr.bf16.mxu0 0
      %1357 = vmatpush1.bf16.msra.mxu0 0
      %1358 = vmatprep.subr.bf16.mxu0 0
      %1359 = vmatpush1.bf16.msra.mxu0 0
      %1360 = vmatprep.mubr.bf16.mxu0 0
      %1361 = vmatmul.mubr.bf16.gmra.mrb[0].mxu0 %v620
      %v1362 = vpop.f32.mrb[0].mxu0
      %v1363 = vadd.f32 0.0, %v1362
      %v1364 = vpop.f32.mrb[0].mxu0
      %v1365 = vpop.f32.mrb[0].mxu0
      %v1366 = vpop.f32.mrb[0].mxu0
      %1367 = vdwg.mxu0
      %v1368 = vadd.f32 %v1311, %v1363
      %v1369 = vxor.u32 %v1368, 2147483648
      %v1370 = vmul.f32 %v1369, 1.442695
      %v1371 = vpow.pop %v1370
      %v1372 = vadd.f32 %v1371, 1.0
      %v1373 = vrcp.pop %v1372
      %v1374 = vmul.f32 1.0, %v1373
      %v1375 = vtanh.pop %v1368
      %v1376 = vmul.f32 %v1374, 0.0
      %1378 = vrot.lane.b32.xlu0 %v1375, 64
      %v1379 = vpop.permute.xlu0 %1378
      %v1381 = vmul.f32 %v1374, %v1379
      %1383 = vrot.lane.b32.xlu0 %v1381, 32
      %v1384 = vpop.permute.xlu0 %1383
      %v1386 = vadd.f32 %v1376, %v1384
      %v1387 = vtanh.pop %v1386
      %1389 = vrot.lane.b32.xlu0 %v1387, 64
      %v1390 = vpop.permute.xlu0 %1389
      %v1392 = vmul.f32 %v1374, %v1390
      %v1393 = vpack.c.bf16 %v1392, %v1392
      %1395 = vrot.lane.b32.xlu0 %v1393, 32
      %v1396 = vpop.permute.xlu0 %1395
      %v1398 = vsel %vm525, %v1396, 0
      %1400 = vmatprep.subr.bf16.mxu0 0
      %1401 = vmatpush1.bf16.msra.mxu0 %v1324
      %1402 = vmatprep.subr.bf16.mxu0 0
      %1403 = vmatpush1.bf16.msra.mxu0 %v1325
      %1404 = vmatprep.subr.bf16.mxu0 0
      %1405 = vmatpush1.bf16.msra.mxu0 0
      %1406 = vmatprep.subr.bf16.mxu0 0
      %1407 = vmatpush1.bf16.msra.mxu0 0
      %1408 = vmatprep.subr.bf16.mxu0 0
      %1409 = vmatpush1.bf16.msra.mxu0 0
      %1410 = vmatprep.subr.bf16.mxu0 0
      %1411 = vmatpush1.bf16.msra.mxu0 0
      %1412 = vmatprep.subr.bf16.mxu0 0
      %1413 = vmatpush1.bf16.msra.mxu0 0
      %1414 = vmatprep.subr.bf16.mxu0 0
      %1415 = vmatpush1.bf16.msra.mxu0 0
      %1416 = vmatprep.subr.bf16.mxu0 0
      %1417 = vmatpush1.bf16.msra.mxu0 0
      %1418 = vmatprep.subr.bf16.mxu0 0
      %1419 = vmatpush1.bf16.msra.mxu0 0
      %1420 = vmatprep.subr.bf16.mxu0 0
      %1421 = vmatpush1.bf16.msra.mxu0 0
      %1422 = vmatprep.subr.bf16.mxu0 0
      %1423 = vmatpush1.bf16.msra.mxu0 0
      %1424 = vmatprep.subr.bf16.mxu0 0
      %1425 = vmatpush1.bf16.msra.mxu0 0
      %1426 = vmatprep.subr.bf16.mxu0 0
      %1427 = vmatpush1.bf16.msra.mxu0 0
      %1428 = vmatprep.subr.bf16.mxu0 0
      %1429 = vmatpush1.bf16.msra.mxu0 0
      %1430 = vmatprep.subr.bf16.mxu0 0
      %1431 = vmatpush1.bf16.msra.mxu0 0
      %1432 = vmatprep.mubr.bf16.mxu0 0
      %1433 = vmatmul.mubr.bf16.gmra.mrb[0].mxu0 %v1398
      %v1434 = vpop.f32.mrb[0].mxu0
      %v1435 = vadd.f32 0.0, %v1434
      %v1436 = vpop.f32.mrb[0].mxu0
      %v1437 = vpop.f32.mrb[0].mxu0
      %v1438 = vpop.f32.mrb[0].mxu0
      %1439 = vdwg.mxu0
      %v1441 = vrot.slane %v1435, 7
      %v1443 = vadd.f32 %v1311, %v1441
      %v1444 = vxor.u32 %v1443, 2147483648
      %v1445 = vmul.f32 %v1444, 1.442695
      %v1446 = vpow.pop %v1445
      %v1447 = vadd.f32 %v1446, 1.0
      %v1448 = vrcp.pop %v1447
      %v1449 = vmul.f32 1.0, %v1448
      %v1450 = vtanh.pop %v1443
      %v1452 = vrot.slane %v1386, 7
      %v1454 = vmul.f32 %v1449, %v1452
      %1456 = vrot.lane.b32.xlu0 %v1450, 64
      %v1457 = vpop.permute.xlu0 %1456
      %v1459 = vmul.f32 %v1449, %v1457
      %1461 = vrot.lane.b32.xlu0 %v1459, 32
      %v1462 = vpop.permute.xlu0 %1461
      %v1464 = vadd.f32 %v1454, %v1462
      %v1465 = vtanh.pop %v1464
      %1467 = vrot.lane.b32.xlu0 %v1465, 64
      %v1468 = vpop.permute.xlu0 %1467
      %v1470 = vmul.f32 %v1449, %v1468
      %v1471 = vpack.c.bf16 %v1470, %v1470
      %v1473 = vshrl.u32 %v1471, 16
      %1475 = vrot.lane.b32.xlu0 %v1473, 32
      %v1476 = vpop.permute.xlu0 %1475
      %v1478 = vsel %vm525, %v1476, 0
      %1480 = vmatprep.subr.bf16.mxu0 0
      %1481 = vmatpush1.bf16.msra.mxu0 %v1324
      %1482 = vmatprep.subr.bf16.mxu0 0
      %1483 = vmatpush1.bf16.msra.mxu0 %v1325
      %1484 = vmatprep.subr.bf16.mxu0 0
      %1485 = vmatpush1.bf16.msra.mxu0 0
      %1486 = vmatprep.subr.bf16.mxu0 0
      %1487 = vmatpush1.bf16.msra.mxu0 0
      %1488 = vmatprep.subr.bf16.mxu0 0
      %1489 = vmatpush1.bf16.msra.mxu0 0
      %1490 = vmatprep.subr.bf16.mxu0 0
      %1491 = vmatpush1.bf16.msra.mxu0 0
      %1492 = vmatprep.subr.bf16.mxu0 0
      %1493 = vmatpush1.bf16.msra.mxu0 0
      %1494 = vmatprep.subr.bf16.mxu0 0
      %1495 = vmatpush1.bf16.msra.mxu0 0
      %1496 = vmatprep.subr.bf16.mxu0 0
      %1497 = vmatpush1.bf16.msra.mxu0 0
      %1498 = vmatprep.subr.bf16.mxu0 0
      %1499 = vmatpush1.bf16.msra.mxu0 0
      %1500 = vmatprep.subr.bf16.mxu0 0
      %1501 = vmatpush1.bf16.msra.mxu0 0
      %1502 = vmatprep.subr.bf16.mxu0 0
      %1503 = vmatpush1.bf16.msra.mxu0 0
      %1504 = vmatprep.subr.bf16.mxu0 0
      %1505 = vmatpush1.bf16.msra.mxu0 0
      %1506 = vmatprep.subr.bf16.mxu0 0
      %1507 = vmatpush1.bf16.msra.mxu0 0
      %1508 = vmatprep.subr.bf16.mxu0 0
      %1509 = vmatpush1.bf16.msra.mxu0 0
      %1510 = vmatprep.subr.bf16.mxu0 0
      %1511 = vmatpush1.bf16.msra.mxu0 0
      %1512 = vmatprep.mubr.bf16.mxu0 0
      %1513 = vmatmul.mubr.bf16.gmra.mrb[0].mxu0 %v1478
      %v1514 = vpop.f32.mrb[0].mxu0
      %v1515 = vadd.f32 0.0, %v1514
      %v1516 = vpop.f32.mrb[0].mxu0
      %v1517 = vpop.f32.mrb[0].mxu0
      %v1518 = vpop.f32.mrb[0].mxu0
      %1519 = vdwg.mxu0
      %v1521 = vrot.slane %v1515, 6
      %v1523 = vadd.f32 %v1311, %v1521
      %v1524 = vxor.u32 %v1523, 2147483648
      %v1525 = vmul.f32 %v1524, 1.442695
      %v1526 = vpow.pop %v1525
      %v1527 = vadd.f32 %v1526, 1.0
      %v1528 = vrcp.pop %v1527
      %v1529 = vmul.f32 1.0, %v1528
      %v1530 = vtanh.pop %v1523
      %v1532 = vrot.slane %v1464, 7
      %v1534 = vmul.f32 %v1529, %v1532
      %1536 = vrot.lane.b32.xlu0 %v1530, 64
      %v1537 = vpop.permute.xlu0 %1536
      %v1539 = vmul.f32 %v1529, %v1537
      %1541 = vrot.lane.b32.xlu0 %v1539, 32
      %v1542 = vpop.permute.xlu0 %1541
      %v1544 = vadd.f32 %v1534, %v1542
      %v1545 = vtanh.pop %v1544
      %1547 = vrot.lane.b32.xlu0 %v1545, 64
      %v1548 = vpop.permute.xlu0 %1547
      %v1550 = vmul.f32 %v1529, %v1548
      %v1551 = vpack.c.bf16 %v1550, %v1550
      %v1553 = vrot.slane %v1551, 1
      %1554 = vrot.lane.b32.xlu0 %v1553, 32
      %v1555 = vpop.permute.xlu0 %1554
      %v1557 = vsel %vm525, %v1555, 0
      %1559 = vmatprep.subr.bf16.mxu0 0
      %1560 = vmatpush1.bf16.msra.mxu0 %v1324
      %1561 = vmatprep.subr.bf16.mxu0 0
      %1562 = vmatpush1.bf16.msra.mxu0 %v1325
      %1563 = vmatprep.subr.bf16.mxu0 0
      %1564 = vmatpush1.bf16.msra.mxu0 0
      %1565 = vmatprep.subr.bf16.mxu0 0
      %1566 = vmatpush1.bf16.msra.mxu0 0
      %1567 = vmatprep.subr.bf16.mxu0 0
      %1568 = vmatpush1.bf16.msra.mxu0 0
      %1569 = vmatprep.subr.bf16.mxu0 0
      %1570 = vmatpush1.bf16.msra.mxu0 0
      %1571 = vmatprep.subr.bf16.mxu0 0
      %1572 = vmatpush1.bf16.msra.mxu0 0
      %1573 = vmatprep.subr.bf16.mxu0 0
      %1574 = vmatpush1.bf16.msra.mxu0 0
      %1575 = vmatprep.subr.bf16.mxu0 0
      %1576 = vmatpush1.bf16.msra.mxu0 0
      %1577 = vmatprep.subr.bf16.mxu0 0
      %1578 = vmatpush1.bf16.msra.mxu0 0
      %1579 = vmatprep.subr.bf16.mxu0 0
      %1580 = vmatpush1.bf16.msra.mxu0 0
      %1581 = vmatprep.subr.bf16.mxu0 0
      %1582 = vmatpush1.bf16.msra.mxu0 0
      %1583 = vmatprep.subr.bf16.mxu0 0
      %1584 = vmatpush1.bf16.msra.mxu0 0
      %1585 = vmatprep.subr.bf16.mxu0 0
      %1586 = vmatpush1.bf16.msra.mxu0 0
      %1587 = vmatprep.subr.bf16.mxu0 0
      %1588 = vmatpush1.bf16.msra.mxu0 0
      %1589 = vmatprep.subr.bf16.mxu0 0
      %1590 = vmatpush1.bf16.msra.mxu0 0
      %1591 = vmatprep.mubr.bf16.mxu0 0
      %1592 = vmatmul.mubr.bf16.gmra.mrb[0].mxu0 %v1557
      %v1593 = vpop.f32.mrb[0].mxu0
      %v1594 = vadd.f32 0.0, %v1593
      %v1595 = vpop.f32.mrb[0].mxu0
      %v1596 = vpop.f32.mrb[0].mxu0
      %v1597 = vpop.f32.mrb[0].mxu0
      %1598 = vdwg.mxu0
      %v1600 = vrot.slane %v1594, 5
      %v1602 = vadd.f32 %v1311, %v1600
      %v1603 = vxor.u32 %v1602, 2147483648
      %v1604 = vmul.f32 %v1603, 1.442695
      %v1605 = vpow.pop %v1604
      %v1606 = vadd.f32 %v1605, 1.0
      %v1607 = vrcp.pop %v1606
      %v1608 = vmul.f32 1.0, %v1607
      %v1609 = vtanh.pop %v1602
      %v1611 = vrot.slane %v1544, 7
      %v1613 = vmul.f32 %v1608, %v1611
      %1615 = vrot.lane.b32.xlu0 %v1609, 64
      %v1616 = vpop.permute.xlu0 %1615
      %v1618 = vmul.f32 %v1608, %v1616
      %1620 = vrot.lane.b32.xlu0 %v1618, 32
      %v1621 = vpop.permute.xlu0 %1620
      %v1623 = vadd.f32 %v1613, %v1621
      %v1624 = vtanh.pop %v1623
      %1626 = vrot.lane.b32.xlu0 %v1624, 64
      %v1627 = vpop.permute.xlu0 %1626
      %v1629 = vmul.f32 %v1608, %v1627
      %v1630 = vpack.c.bf16 %v1629, %v1629
      %v1632 = vshrl.u32 %v1630, 16
      %v1634 = vrot.slane %v1632, 1
      %1635 = vrot.lane.b32.xlu0 %v1634, 32
      %v1636 = vpop.permute.xlu0 %1635
      %v1638 = vsel %vm525, %v1636, 0
      %1640 = vmatprep.subr.bf16.mxu0 0
      %1641 = vmatpush1.bf16.msra.mxu0 %v1324
      %1642 = vmatprep.subr.bf16.mxu0 0
      %1643 = vmatpush1.bf16.msra.mxu0 %v1325
      %1644 = vmatprep.subr.bf16.mxu0 0
      %1645 = vmatpush1.bf16.msra.mxu0 0
      %1646 = vmatprep.subr.bf16.mxu0 0
      %1647 = vmatpush1.bf16.msra.mxu0 0
      %1648 = vmatprep.subr.bf16.mxu0 0
      %1649 = vmatpush1.bf16.msra.mxu0 0
      %1650 = vmatprep.subr.bf16.mxu0 0
      %1651 = vmatpush1.bf16.msra.mxu0 0
      %1652 = vmatprep.subr.bf16.mxu0 0
      %1653 = vmatpush1.bf16.msra.mxu0 0
      %1654 = vmatprep.subr.bf16.mxu0 0
      %1655 = vmatpush1.bf16.msra.mxu0 0
      %1656 = vmatprep.subr.bf16.mxu0 0
      %1657 = vmatpush1.bf16.msra.mxu0 0
      %1658 = vmatprep.subr.bf16.mxu0 0
      %1659 = vmatpush1.bf16.msra.mxu0 0
      %1660 = vmatprep.subr.bf16.mxu0 0
      %1661 = vmatpush1.bf16.msra.mxu0 0
      %1662 = vmatprep.subr.bf16.mxu0 0
      %1663 = vmatpush1.bf16.msra.mxu0 0
      %1664 = vmatprep.subr.bf16.mxu0 0
      %1665 = vmatpush1.bf16.msra.mxu0 0
      %1666 = vmatprep.subr.bf16.mxu0 0
      %1667 = vmatpush1.bf16.msra.mxu0 0
      %1668 = vmatprep.subr.bf16.mxu0 0
      %1669 = vmatpush1.bf16.msra.mxu0 0
      %1670 = vmatprep.subr.bf16.mxu0 0
      %1671 = vmatpush1.bf16.msra.mxu0 0
      %1672 = vmatprep.mubr.bf16.mxu0 0
      %1673 = vmatmul.mubr.bf16.gmra.mrb[0].mxu0 %v1638
      %v1674 = vpop.f32.mrb[0].mxu0
      %v1675 = vadd.f32 0.0, %v1674
      %v1676 = vpop.f32.mrb[0].mxu0
      %v1677 = vpop.f32.mrb[0].mxu0
      %v1678 = vpop.f32.mrb[0].mxu0
      %1679 = vdwg.mxu0
      %v1681 = vrot.slane %v1675, 4
      %v1683 = vadd.f32 %v1311, %v1681
      %v1684 = vxor.u32 %v1683, 2147483648
      %v1685 = vmul.f32 %v1684, 1.442695
      %v1686 = vpow.pop %v1685
      %v1687 = vadd.f32 %v1686, 1.0
      %v1688 = vrcp.pop %v1687
      %v1689 = vmul.f32 1.0, %v1688
      %v1690 = vtanh.pop %v1683
      %v1692 = vrot.slane %v1623, 7
      %v1694 = vmul.f32 %v1689, %v1692
      %1696 = vrot.lane.b32.xlu0 %v1690, 64
      %v1697 = vpop.permute.xlu0 %1696
      %v1699 = vmul.f32 %v1689, %v1697
      %1701 = vrot.lane.b32.xlu0 %v1699, 32
      %v1702 = vpop.permute.xlu0 %1701
      %v1704 = vadd.f32 %v1694, %v1702
      %v1705 = vtanh.pop %v1704
      %1707 = vrot.lane.b32.xlu0 %v1705, 64
      %v1708 = vpop.permute.xlu0 %1707
      %v1710 = vmul.f32 %v1689, %v1708
      %vm1711 = vcmask 1040384
      %v1712 = vsel %vm1711, %v1392, %v1470
      %vm1713 = vcmask 1041408
      %v1714 = vsel %vm1713, %v1712, %v1550
      %vm1715 = vcmask 1042432
      %v1716 = vsel %vm1715, %v1714, %v1629
      %vm1717 = vcmask 1043456
      %v1718 = vsel %vm1717, %v1716, %v1710
      %vm1719 = vcmask 1044480
      %v1720 = vsel %vm1719, %v1718, 0.0
      %v1721 = vpack.c.bf16 %v1720, %v1720
      %v1722 = vld [vmem:[%s10] sm:$0xf]
      %v1723 = vld [vmem:[%s10 + $0x4] sm:$0xf]
      %v1724 = vld [vmem:[%s10 + $0x8] sm:$0xf]
      %v1725 = vld [vmem:[%s10 + $0xc] sm:$0xf]
      %v1726 = vld [vmem:[%s11] sm:$0x1]
      %v1728 = vlaneseq
      %v1729 = vshrl.u32 %v1728, 7
      %v1730 = vsub.s32 0, %v1729
      %v1731 = vrot.slane %v1726, %v1730
      %1734 = vrot.lane.b32.xlu0 %v1721, 32
      %v1735 = vpop.permute.xlu0 %1734
      %v1740 = vunpack.c.l.b16 %v1722
      %v1741 = vunpack.c.l.b16 %v1723
      %v1742 = vunpack.c.l.b16 %v1724
      %v1743 = vunpack.c.l.b16 %v1725
      %v1744 = vpack.c.b16 %v1741, %v1740
      %v1745 = vpack.c.b16 %v1743, %v1742
      %v1749 = vsel %vm525, %v1735, 0
      %1751 = vmatprep.subr.bf16.mxu0 0
      %1752 = vmatpush1.bf16.msra.mxu0 %v1744
      %1753 = vmatprep.subr.bf16.mxu0 0
      %1754 = vmatpush1.bf16.msra.mxu0 %v1745
      %1755 = vmatprep.subr.bf16.mxu0 0
      %1756 = vmatpush1.bf16.msra.mxu0 0
      %1757 = vmatprep.subr.bf16.mxu0 0
      %1758 = vmatpush1.bf16.msra.mxu0 0
      %1759 = vmatprep.subr.bf16.mxu0 0
      %1760 = vmatpush1.bf16.msra.mxu0 0
      %1761 = vmatprep.subr.bf16.mxu0 0
      %1762 = vmatpush1.bf16.msra.mxu0 0
      %1763 = vmatprep.subr.bf16.mxu0 0
      %1764 = vmatpush1.bf16.msra.mxu0 0
      %1765 = vmatprep.subr.bf16.mxu0 0
      %1766 = vmatpush1.bf16.msra.mxu0 0
      %1767 = vmatprep.subr.bf16.mxu0 0
      %1768 = vmatpush1.bf16.msra.mxu0 0
      %1769 = vmatprep.subr.bf16.mxu0 0
      %1770 = vmatpush1.bf16.msra.mxu0 0
      %1771 = vmatprep.subr.bf16.mxu0 0
      %1772 = vmatpush1.bf16.msra.mxu0 0
      %1773 = vmatprep.subr.bf16.mxu0 0
      %1774 = vmatpush1.bf16.msra.mxu0 0
      %1775 = vmatprep.subr.bf16.mxu0 0
      %1776 = vmatpush1.bf16.msra.mxu0 0
      %1777 = vmatprep.subr.bf16.mxu0 0
      %1778 = vmatpush1.bf16.msra.mxu0 0
      %1779 = vmatprep.subr.bf16.mxu0 0
      %1780 = vmatpush1.bf16.msra.mxu0 0
      %1781 = vmatprep.subr.bf16.mxu0 0
      %1782 = vmatpush1.bf16.msra.mxu0 0
      %1783 = vmatprep.mubr.bf16.mxu0 0
      %1784 = vmatmul.mubr.bf16.gmra.mrb[0].mxu0 %v1749
      %v1785 = vpop.f32.mrb[0].mxu0
      %v1786 = vadd.f32 %v1731, %v1785
      %v1787 = vpop.f32.mrb[0].mxu0
      %v1788 = vpop.f32.mrb[0].mxu0
      %v1789 = vpop.f32.mrb[0].mxu0
      %1790 = vdwg.mxu0
      %1791 = vmax.xlane.f32.xlu0 %v1786
      %v1792 = vpop.xlane.xlu0 %1791
      %v1793 = vsub.f32 %v1786, %v1792
      %v1794 = vmul.f32 %v1793, 1.442695
      %v1795 = vpow.pop %v1794
      %1796 = vadd.xlane.f32.xlu0 %v1795
      %v1797 = vpop.xlane.xlu0 %1796
      %v1798 = vlog2.pop %v1797
      %v1799 = vmul.f32 %v1798, 0.6931472
      %v1800 = vsub.f32 %v1793, %v1799
      %1801 = vst [vmem:[%s445] sm:$0xff] %v1800
      %p1802 = scmp.lt.s32.totalorder %s23, 3
      %s1803 = scalar_select %p1802, %s23, 3
      %s1804 = smul.addr %s1803, 8
      %s1805 = scalar_lea.vmem %s12, %s1804
      // Predicated region
      $region69: #{lstm_tagger_forward.1} parent=67 // pred_check
        %p1806 = pneg %p308
      $region70: #{lstm_tagger_forward.1} parent=67 // pred_check_branch
        %1808 = sbr.rel (%p1806) target = $region72
      $region71: #{lstm_tagger_forward.1} parent=67 // pred_region
        _
      $region72: #{lstm_tagger_forward.1} parent=67 // pred_fallthru
        _
    $region68: #{lstm_tagger_forward.1} parent=5 // pred_fallthru
      _
    %p1809 = scmp.le.s32.totalorder 2, %s18
    // Predicated region
    $region73: #{lstm_tagger_forward.1} parent=5 // pred_check
      %p1810 = pneg %p1809
    $region74: #{lstm_tagger_forward.1} parent=5 // pred_check_branch
      %1812 = sbr.rel (%p1810) target = $region76
    $region75: #{lstm_tagger_forward.1} parent=5 // pred_region
      %s1813 = ssub.s32 %s18, 2
      // Predicated region
      $region77: #{lstm_tagger_forward.1} parent=75 // pred_check
        %p1814 = pneg %p314
      $region78: #{lstm_tagger_forward.1} parent=75 // pred_check_branch
        %1816 = sbr.rel (%p1814) target = $region80
      $region79: #{lstm_tagger_forward.1} parent=75 // pred_region
        %p1817 = scmp.lt.s32.totalorder %s24, 3
        %s1818 = scalar_select %p1817, %s24, 3
        %s1819 = smul.addr %s1818, 8
        %s1820 = scalar_lea.vmem %s12, %s1819
      $region80: #{lstm_tagger_forward.1} parent=75 // pred_fallthru
        _
    $region76: #{lstm_tagger_forward.1} parent=5 // pred_fallthru
      _
  $region6: #{lstm_tagger_forward.1} parent=0 // loop_footer
    %s22 = sadd.s32 1, %s18
  $region7: #{lstm_tagger_forward.1} parent=0 // loop_footer_branch
    %17 = sbr.rel target = $region3
  $region8: #{lstm_tagger_forward.1} parent=0 // loop_exit
    _

</llo_original>
